<compile_context>
chip_gen: v5e
topology: v5e:2x2
jax: 0.10.0
libtpu: 0.0.40
codegen_flags: <defaults>
</compile_context>

<pallas_src>
import functools
import math

import jax
import jax.numpy as jnp
from jax import lax
from jax.experimental import pallas as pl
from jax.experimental.pallas import tpu as pltpu

EPS = 1e-5
_MASK_VALUE = -1e30   # large finite negative (inf-inf -> NaN hazard avoided)


def _vmem_limit_bytes():
    """Per-generation scoped-VMEM limit: ~3/4 of physical VMEM (v5e/v6e: 128 MiB,
    v7x: 64 MiB).  Falls back to a v7x-safe value if the query is unavailable."""
    try:
        cap = int(pltpu.get_tpu_info().vmem_capacity_bytes)
    except Exception:
        cap = 64 * 1024 * 1024
    return min((3 * cap) // 4, 96 * 1024 * 1024)


# --------------------------------------------------------------------------
# In-kernel helpers (traced inside the Pallas kernels)
# --------------------------------------------------------------------------
def _layer_norm(x, scale, shift):
    """LayerNorm over the last dim with divide-by-N (biased) variance, matching
    torch.var(unbiased=False) in the reference LayerNorm module."""
    mean = jnp.mean(x, axis=-1, keepdims=True)
    var = jnp.mean((x - mean) ** 2, axis=-1, keepdims=True)
    return (x - mean) * lax.rsqrt(var + EPS) * scale + shift


def _gelu(x):
    """tanh-approximation GELU, matching the torch Gelu module."""
    c = math.sqrt(2.0 / math.pi)
    return 0.5 * x * (1.0 + jnp.tanh(c * (x + 0.044715 * x * x * x)))


# --------------------------------------------------------------------------
# Fused all-layers transformer kernel.  Grid = (batch, layer).
# The residual stream lives in the (revisited) output block across the layer axis.
# --------------------------------------------------------------------------
def _gpt_blocks_kernel(
    x_ref,                                   # (1, T, D)   embeddings for one batch elem
    ln1_s_ref, ln1_b_ref,                    # (1, 1, D)
    wqkv_ref,                                # (1, D, 3D)  bf16 (fused q|k|v)
    wo_ref, bo_ref,                          # (1, D, D) bf16, (1, 1, D)
    ln2_s_ref, ln2_b_ref,                    # (1, 1, D)
    w1_ref, b1_ref,                          # (1, D, 4D) bf16, (1, 1, 4D)
    w2_ref, b2_ref,                          # (1, 4D, D) bf16, (1, 1, D)
    o_ref,                                   # (1, T, D)   residual stream (resident)
    *, num_heads,
):
    layer = pl.program_id(1)

    # First layer: seed the resident activation block from the embedding input.
    @pl.when(layer == 0)
    def _():
        o_ref[...] = x_ref[...]

    x = o_ref[0].astype(jnp.float32)          # (T, D)
    T, D = x.shape
    H = num_heads
    hd = D // H
    bf16 = jnp.bfloat16
    inv_scale = 1.0 / math.sqrt(hd)

    # ---- attention sub-block: LN -> fused QKV -> batched-head SDPA -> out proj ----
    h = _layer_norm(x, ln1_s_ref[0], ln1_b_ref[0])
    qkv = jnp.dot(h.astype(bf16), wqkv_ref[0],
                  preferred_element_type=jnp.float32)          # (T, 3D) f32
    # NOTE: column slices are at multiples of D; lane-aligned once D % 128 == 0.
    q = jnp.swapaxes(qkv[:, :D].reshape(T, H, hd), 0, 1)        # (H, T, hd)
    k = jnp.swapaxes(qkv[:, D:2 * D].reshape(T, H, hd), 0, 1)
    v = jnp.swapaxes(qkv[:, 2 * D:].reshape(T, H, hd), 0, 1)

    s = jnp.einsum("hqd,hkd->hqk", q.astype(bf16), k.astype(bf16),
                   preferred_element_type=jnp.float32) * inv_scale
    row = lax.broadcasted_iota(jnp.int32, (T, T), 0)
    col = lax.broadcasted_iota(jnp.int32, (T, T), 1)
    s = jnp.where((row >= col)[None], s, _MASK_VALUE)            # causal mask
    m = jnp.max(s, axis=-1, keepdims=True)
    e = jnp.exp(s - m)
    p = e * pl.reciprocal(jnp.sum(e, axis=-1, keepdims=True), approx=True)  # EUP slot
    ctx = jnp.einsum("hqk,hkd->hqd", p.astype(bf16), v.astype(bf16),
                     preferred_element_type=jnp.float32)         # (H, T, hd)
    ctx = jnp.swapaxes(ctx, 0, 1).reshape(T, D)
    attn = jnp.dot(ctx.astype(bf16), wo_ref[0],
                   preferred_element_type=jnp.float32) + bo_ref[0]
    x = x + attn                               # dropout(p=0.0) == identity

    # ---- feed-forward sub-block ----
    h2 = _layer_norm(x, ln2_s_ref[0], ln2_b_ref[0])
    z = jnp.dot(h2.astype(bf16), w1_ref[0],
                preferred_element_type=jnp.float32) + b1_ref[0]
    g = _gelu(z)
    f = jnp.dot(g.astype(bf16), w2_ref[0],
                preferred_element_type=jnp.float32) + b2_ref[0]
    o_ref[0] = (x + f).astype(o_ref.dtype)
    # TODO(synk): for realistic T/D (e.g. T=1024, D>=768) add K/V-tile (flash-style
    # online softmax) and FFN-hidden-dim tiling so (T,4D) intermediates never live
    # wholly in VMEM on v7x's 64 MiB; at the toy shapes here the full block fits.


def transformer_blocks(x, blocks, cfg):
    """All n_layers transformer blocks in one pallas_call; grid = (batch, layer)."""
    B, T, D = x.shape
    L, H = cfg["n_layers"], cfg["n_heads"]
    kernel = functools.partial(_gpt_blocks_kernel, num_heads=H)

    def wspec(full_shape):
        # Per-layer weight block: leading (layer) dim sliced to 1, trailing dims full,
        # so the last two block dims always equal the full array dims.
        n = len(full_shape)
        return pl.BlockSpec((1,) + tuple(full_shape[1:]),
                            lambda b, l: (l,) + (0,) * (n - 1))

    flops_step = 24 * T * D * D + 4 * T * T * D
    bytes_step = 2 * 12 * D * D + 4 * 2 * T * D       # bf16 weights + f32 act in/out
    cost = pl.CostEstimate(flops=B * L * flops_step,
                           transcendentals=B * L * (H * T * T + 4 * T * D),
                           bytes_accessed=B * L * bytes_step)

    return pl.pallas_call(
        kernel,
        out_shape=jax.ShapeDtypeStruct((B, T, D), x.dtype),
        grid_spec=pl.GridSpec(
            grid=(B, L),
            in_specs=[
                pl.BlockSpec((1, T, D), lambda b, l: (b, 0, 0)),
                wspec((L, 1, D)), wspec((L, 1, D)),              # ln1 scale / shift
                wspec((L, D, 3 * D)),                            # fused Wqkv (bf16)
                wspec((L, D, D)), wspec((L, 1, D)),              # Wo (bf16), bo
                wspec((L, 1, D)), wspec((L, 1, D)),              # ln2 scale / shift
                wspec((L, D, 4 * D)), wspec((L, 1, 4 * D)),      # W1 (bf16), b1
                wspec((L, 4 * D, D)), wspec((L, 1, D)),          # W2 (bf16), b2
            ],
            out_specs=pl.BlockSpec((1, T, D), lambda b, l: (b, 0, 0)),
        ),
        compiler_params=pltpu.CompilerParams(
            # batch axis shards across v7x's two TensorCores; the layer axis is a
            # sequential dependency (residual stream accumulates in the output block).
            dimension_semantics=("parallel", "arbitrary"),
            vmem_limit_bytes=_vmem_limit_bytes(),
        ),
        cost_estimate=cost,
    )(x,
      blocks["ln1_scale"], blocks["ln1_shift"],
      blocks["wqkv"], blocks["wo"], blocks["bo"],
      blocks["ln2_scale"], blocks["ln2_shift"],
      blocks["w1"], blocks["b1"], blocks["w2"], blocks["b2"])


# --------------------------------------------------------------------------
# Fused final LayerNorm + output head, tiled over (rows, vocab)
# --------------------------------------------------------------------------
def _final_head_kernel(x_ref, s_ref, b_ref, w_ref, o_ref):
    x = x_ref[...].astype(jnp.float32)                        # (tr, D)
    nx = _layer_norm(x, s_ref[...], b_ref[...])               # recomputed per vocab tile (cheap)
    o_ref[...] = jnp.dot(nx.astype(jnp.bfloat16), w_ref[...],
                         preferred_element_type=jnp.float32).astype(o_ref.dtype)


def _pick_vocab_tile(V, d_in, budget):
    """Largest vocab tile that divides V, is a multiple of 128 (lane-dense stores),
    and whose double-buffered bf16 weight tile uses at most ~1/4 of the budget."""
    if V % 128 != 0:
        # TODO(synk): pad the vocab dim to a multiple of 128 to enable tiling.
        return V
    cap = max(budget // 4, 2 * 2 * d_in * 128)
    best, tv = 128, 128
    while tv <= V:
        if V % tv == 0 and 2 * 2 * d_in * tv <= cap:
            best = tv
        tv += 128
    return best


def _pick_row_tile(rows, d_in, d_out, budget):
    """Largest multiple-of-8 (f32 sublane) row tile whose double-buffered f32 in/out
    tiles fit the budget remaining after the resident (D, tv) weight tile."""
    weight_bytes = 2 * 2 * d_in * d_out             # double-buffered bf16 weight tile
    avail = max(budget // 2 - weight_bytes, 0)      # //2: headroom for scratch/compiler
    per_row = 2 * 4 * (d_in + d_out)                # double-buffered f32 in + out rows
    t = max(8, min(rows, avail // max(per_row, 1)))
    return max(8, (t // 8) * 8)


def final_norm_and_head(x, scale, shift, w_out):
    B, T, D = x.shape
    V = w_out.shape[-1]
    rows = B * T
    limit = _vmem_limit_bytes()

    tv = _pick_vocab_tile(V, D, limit)
    tr = _pick_row_tile(rows, D, tv, limit)
    rows_p = pl.cdiv(rows, tr) * tr                 # pad rows instead of oversizing tile

    x2d = x.reshape(rows, D)
    if rows_p != rows:
        x2d = jnp.pad(x2d, ((0, rows_p - rows), (0, 0)))

    out = pl.pallas_call(
        _final_head_kernel,
        out_shape=jax.ShapeDtypeStruct((rows_p, V), x.dtype),
        grid_spec=pl.GridSpec(
            grid=(rows_p // tr, V // tv),
            in_specs=[
                pl.BlockSpec((tr, D), lambda i, j: (i, 0)),
                pl.BlockSpec((1, D), lambda i, j: (0, 0)),
                pl.BlockSpec((1, D), lambda i, j: (0, 0)),
                pl.BlockSpec((D, tv), lambda i, j: (0, j)),     # vocab-tiled bf16 weight
            ],
            out_specs=pl.BlockSpec((tr, tv), lambda i, j: (i, j)),
        ),
        compiler_params=pltpu.CompilerParams(
            dimension_semantics=("parallel", "parallel"),
            vmem_limit_bytes=limit,
        ),
        cost_estimate=pl.CostEstimate(
            flops=2 * rows_p * D * V,
            transcendentals=0,
            bytes_accessed=4 * rows_p * (D + V) + 2 * D * V,
        ),
    )(x2d, scale, shift, w_out)
    if rows_p != rows:
        out = out[:rows]
    return out.reshape(B, T, V)


# --------------------------------------------------------------------------
# GPTModel forward
# --------------------------------------------------------------------------
def gpt_forward(params, in_idx, cfg):
    B, T = in_idx.shape
    # TODO(synk): token-embedding gather (dynamic per-token row lookup) has no clean
    # rectangular BlockSpec; it stays in XLA (jnp.take) and fuses with the position add.
    x = jnp.take(params["tok_emb"], in_idx, axis=0) + params["pos_emb"][:T][None]
    # drop_emb / in-block dropouts: drop_rate == 0.0 (eval) -> identity, no kernel.
    x = transformer_blocks(x, params["blocks"], cfg)
    return final_norm_and_head(x, params["final_scale"], params["final_shift"],
                               params["out_head"])


# --------------------------------------------------------------------------
# Parameters + pure-JAX reference (same bf16-matmul / f32-accumulate policy)
# --------------------------------------------------------------------------
def init_params(key, cfg):
    D, V = cfg["emb_dim"], cfg["vocab_size"]
    C, L = cfg["context_length"], cfg["n_layers"]
    bf = jnp.bfloat16
    keys = jax.random.split(key, 6)

    def rnd(k, shape, scale=0.02, dtype=jnp.float32):
        return (scale * jax.random.normal(k, shape, jnp.float32)).astype(dtype)

    bk = jax.random.split(keys[5], 11)
    blocks = dict(
        ln1_scale=1.0 + 0.1 * jax.random.normal(bk[0], (L, 1, D), jnp.float32),
        ln1_shift=0.1 * jax.random.normal(bk[1], (L, 1, D), jnp.float32),
        wqkv=rnd(bk[2], (L, D, 3 * D), dtype=bf),
        wo=rnd(bk[3], (L, D, D), dtype=bf),
        bo=rnd(bk[4], (L, 1, D)),
        ln2_scale=1.0 + 0.1 * jax.random.normal(bk[5], (L, 1, D), jnp.float32),
        ln2_shift=0.1 * jax.random.normal(bk[6], (L, 1, D), jnp.float32),
        w1=rnd(bk[7], (L, D, 4 * D), dtype=bf),
        b1=rnd(bk[8], (L, 1, 4 * D)),
        w2=rnd(bk[9], (L, 4 * D, D), dtype=bf),
        b2=rnd(bk[10], (L, 1, D)),
    )
    return dict(
        tok_emb=rnd(keys[0], (V, D)),
        pos_emb=rnd(keys[1], (C, D)),
        out_head=rnd(keys[2], (D, V), dtype=bf),
        final_scale=1.0 + 0.1 * jax.random.normal(keys[3], (1, D), jnp.float32),
        final_shift=0.1 * jax.random.normal(keys[4], (1, D), jnp.float32),
        blocks=blocks,
    )


def ref_forward(params, in_idx, cfg):
    """Pure-JAX reference mirroring the kernel's bf16-matmul / f32-accumulate policy."""
    B, T = in_idx.shape
    D, H, L = cfg["emb_dim"], cfg["n_heads"], cfg["n_layers"]
    hd = D // H
    bf = jnp.bfloat16

    def mm(a, w):
        return jnp.dot(a.astype(bf), w.astype(bf), preferred_element_type=jnp.float32)

    def ln(v, s, b):
        m = v.mean(-1, keepdims=True)
        var = ((v - m) ** 2).mean(-1, keepdims=True)
        return s * ((v - m) / jnp.sqrt(var + EPS)) + b

    x = params["tok_emb"][in_idx] + params["pos_emb"][:T][None]
    mask = jnp.triu(jnp.ones((T, T), dtype=bool), k=1)
    blk = params["blocks"]
    for l in range(L):
        h = ln(x, blk["ln1_scale"][l], blk["ln1_shift"][l])
        qkv = mm(h, blk["wqkv"][l])
        q = qkv[..., :D].reshape(B, T, H, hd).transpose(0, 2, 1, 3)
        k = qkv[..., D:2 * D].reshape(B, T, H, hd).transpose(0, 2, 1, 3)
        v = qkv[..., 2 * D:].reshape(B, T, H, hd).transpose(0, 2, 1, 3)
        s = jnp.einsum("bhqd,bhkd->bhqk", q.astype(bf), k.astype(bf),
                       preferred_element_type=jnp.float32)
        s = jnp.where(mask, -jnp.inf, s)
        w = jax.nn.softmax(s / math.sqrt(hd), axis=-1)
        ctx = jnp.einsum("bhqk,bhkd->bhqd", w.astype(bf), v.astype(bf),
                         preferred_element_type=jnp.float32)
        ctx = ctx.transpose(0, 2, 1, 3).reshape(B, T, D)
        x = x + (mm(ctx, blk["wo"][l]) + blk["bo"][l])
        h2 = ln(x, blk["ln2_scale"][l], blk["ln2_shift"][l])
        z = mm(h2, blk["w1"][l]) + blk["b1"][l]
        g = 0.5 * z * (1.0 + jnp.tanh(math.sqrt(2.0 / math.pi) * (z + 0.044715 * z ** 3)))
        x = x + (mm(g, blk["w2"][l]) + blk["b2"][l])
    x = ln(x, params["final_scale"], params["final_shift"])
    return mm(x, params["out_head"])


if __name__ == "__main__":
    cfg = dict(vocab_size=256, context_length=8, emb_dim=32,
               n_heads=4, n_layers=2, drop_rate=0.0, bias_=False)

    key = jax.random.PRNGKey(0)
    pkey, ikey = jax.random.split(key)
    params = init_params(pkey, cfg)
    in_idx = jax.random.randint(ikey, (2, cfg["context_length"]),
                                0, cfg["vocab_size"], dtype=jnp.int32)

    logits = jax.block_until_ready(gpt_forward(params, in_idx, cfg))
    ref = jax.block_until_ready(ref_forward(params, in_idx, cfg))

    assert logits.shape == (2, cfg["context_length"], cfg["vocab_size"])
    assert logits.dtype == jnp.float32
    max_err = float(jnp.max(jnp.abs(logits - ref.astype(logits.dtype))))
    assert max_err < 5e-3, f"max abs err vs pure-JAX reference: {max_err}"
    print("KERNEL_OK")
</pallas_src>

<mosaic_0001>
module attributes {stable_mosaic.version = 11 : i64} {
  func.func @_gpt_blocks_kernel(%arg0: i32, %arg1: i32, %arg2: memref<1x8x32xf32, #tpu.memory_space<vmem>>, %arg3: memref<1x1x32xf32, #tpu.memory_space<vmem>>, %arg4: memref<1x1x32xf32, #tpu.memory_space<vmem>>, %arg5: memref<1x32x96xbf16, #tpu.memory_space<vmem>>, %arg6: memref<1x32x32xbf16, #tpu.memory_space<vmem>>, %arg7: memref<1x1x32xf32, #tpu.memory_space<vmem>>, %arg8: memref<1x1x32xf32, #tpu.memory_space<vmem>>, %arg9: memref<1x1x32xf32, #tpu.memory_space<vmem>>, %arg10: memref<1x32x128xbf16, #tpu.memory_space<vmem>>, %arg11: memref<1x1x128xf32, #tpu.memory_space<vmem>>, %arg12: memref<1x128x32xbf16, #tpu.memory_space<vmem>>, %arg13: memref<1x1x32xf32, #tpu.memory_space<vmem>>, %arg14: memref<1x8x32xf32, #tpu.memory_space<vmem>>) attributes {dimension_semantics = [#tpu.dimension_semantics<parallel>, #tpu.dimension_semantics<arbitrary>], iteration_bounds = array<i64: 2, 2>, scalar_prefetch = 0 : i64, scratch_operands = 0 : i64, tpu.core_type = #tpu.core_type<tc>, window_params = [{transform_indices = @transform_0, window_bounds = array<i64: 1, 8, 32>}, {transform_indices = @transform_1, window_bounds = array<i64: 1, 1, 32>}, {transform_indices = @transform_2, window_bounds = array<i64: 1, 1, 32>}, {transform_indices = @transform_3, window_bounds = array<i64: 1, 32, 96>}, {transform_indices = @transform_4, window_bounds = array<i64: 1, 32, 32>}, {transform_indices = @transform_5, window_bounds = array<i64: 1, 1, 32>}, {transform_indices = @transform_6, window_bounds = array<i64: 1, 1, 32>}, {transform_indices = @transform_7, window_bounds = array<i64: 1, 1, 32>}, {transform_indices = @transform_8, window_bounds = array<i64: 1, 32, 128>}, {transform_indices = @transform_9, window_bounds = array<i64: 1, 1, 128>}, {transform_indices = @transform_10, window_bounds = array<i64: 1, 128, 32>}, {transform_indices = @transform_11, window_bounds = array<i64: 1, 1, 32>}, {transform_indices = @transform_12, window_bounds = array<i64: 1, 8, 32>}]} {
    %c0_i32 = arith.constant 0 : i32
    %0 = arith.cmpi eq, %arg1, %c0_i32 : i32
    %1 = arith.extui %0 : i1 to i32
    %c0_i32_0 = arith.constant 0 : i32
    %2 = arith.cmpi ne, %1, %c0_i32_0 : i32
    scf.if %2 {
      %c0_62 = arith.constant 0 : index
      %c0_63 = arith.constant 0 : index
      %c0_64 = arith.constant 0 : index
      %140 = vector.load %arg2[%c0_62, %c0_63, %c0_64] : memref<1x8x32xf32, #tpu.memory_space<vmem>>, vector<1x8x32xf32>
      %c0_65 = arith.constant 0 : index
      %c0_66 = arith.constant 0 : index
      %c0_67 = arith.constant 0 : index
      %141 = vector.load %arg14[%c0_65, %c0_66, %c0_67] : memref<1x8x32xf32, #tpu.memory_space<vmem>>, vector<1x8x32xf32>
      tpu.vector_store %arg14[%c0_65, %c0_66, %c0_67], %140 {strides = array<i32>} : memref<1x8x32xf32, #tpu.memory_space<vmem>>, vector<1x8x32xf32>,
    } else {
    }
    %c0 = arith.constant 0 : index
    %c0_1 = arith.constant 0 : index
    %c0_2 = arith.constant 0 : index
    %3 = vector.load %arg14[%c0, %c0_1, %c0_2] : memref<1x8x32xf32, #tpu.memory_space<vmem>>, vector<1x8x32xf32>
    %4 = vector.shape_cast %3 : vector<1x8x32xf32> to vector<8x32xf32>
    %c0_3 = arith.constant 0 : index
    %c0_4 = arith.constant 0 : index
    %c0_5 = arith.constant 0 : index
    %5 = vector.load %arg3[%c0_3, %c0_4, %c0_5] : memref<1x1x32xf32, #tpu.memory_space<vmem>>, vector<1x1x32xf32>
    %6 = vector.shape_cast %5 : vector<1x1x32xf32> to vector<1x32xf32>
    %c0_6 = arith.constant 0 : index
    %c0_7 = arith.constant 0 : index
    %c0_8 = arith.constant 0 : index
    %7 = vector.load %arg4[%c0_6, %c0_7, %c0_8] : memref<1x1x32xf32, #tpu.memory_space<vmem>>, vector<1x1x32xf32>
    %8 = vector.shape_cast %7 : vector<1x1x32xf32> to vector<1x32xf32>
    %cst = arith.constant dense<0.000000e+00> : vector<8xf32>
    %9 = vector.multi_reduction <add>, %4, %cst [1] : vector<8x32xf32> to vector<8xf32>
    %10 = vector.shape_cast %9 : vector<8xf32> to vector<8x1xf32>
    %cst_9 = arith.constant 3.200000e+01 : f32
    %11 = vector.broadcast %cst_9 : f32 to vector<8x1xf32>
    %12 = arith.divf %10, %11 : vector<8x1xf32>
    %13 = vector.broadcast %12 : vector<8x1xf32> to vector<8x32xf32>
    %14 = arith.subf %4, %13 : vector<8x32xf32>
    %15 = arith.mulf %14, %14 : vector<8x32xf32>
    %cst_10 = arith.constant dense<0.000000e+00> : vector<8xf32>
    %16 = vector.multi_reduction <add>, %15, %cst_10 [1] : vector<8x32xf32> to vector<8xf32>
    %17 = vector.shape_cast %16 : vector<8xf32> to vector<8x1xf32>
    %cst_11 = arith.constant 3.200000e+01 : f32
    %18 = vector.broadcast %cst_11 : f32 to vector<8x1xf32>
    %19 = arith.divf %17, %18 : vector<8x1xf32>
    %20 = vector.broadcast %12 : vector<8x1xf32> to vector<8x32xf32>
    %21 = arith.subf %4, %20 : vector<8x32xf32>
    %cst_12 = arith.constant 9.99999974E-6 : f32
    %22 = vector.broadcast %cst_12 : f32 to vector<8x1xf32>
    %23 = arith.addf %19, %22 : vector<8x1xf32>
    %24 = math.rsqrt %23 : vector<8x1xf32>
    %25 = vector.broadcast %24 : vector<8x1xf32> to vector<8x32xf32>
    %26 = arith.mulf %21, %25 : vector<8x32xf32>
    %27 = vector.broadcast %6 : vector<1x32xf32> to vector<8x32xf32>
    %28 = arith.mulf %26, %27 : vector<8x32xf32>
    %29 = vector.broadcast %8 : vector<1x32xf32> to vector<8x32xf32>
    %30 = arith.addf %28, %29 : vector<8x32xf32>
    %31 = arith.truncf %30 : vector<8x32xf32> to vector<8x32xbf16>
    %c0_13 = arith.constant 0 : index
    %c0_14 = arith.constant 0 : index
    %c0_15 = arith.constant 0 : index
    %32 = vector.load %arg5[%c0_13, %c0_14, %c0_15] : memref<1x32x96xbf16, #tpu.memory_space<vmem>>, vector<1x32x96xbf16>
    %33 = vector.shape_cast %32 : vector<1x32x96xbf16> to vector<32x96xbf16>
    %cst_16 = arith.constant dense<0.000000e+00> : vector<8x96xf32>
    %34 = tpu.matmul %31, %33, %cst_16 {dimension_numbers = #tpu.dot_dimension_numbers<[1], [0], [0], [1], [0, 0, 1, 1], [], []>} : vector<8x32xbf16>, vector<32x96xbf16>, vector<8x96xf32> -> vector<8x96xf32>
    %35 = vector.extract_strided_slice %34 {offsets = [0, 0], sizes = [8, 32], strides = [1, 1]} : vector<8x96xf32> to vector<8x32xf32>
    %36 = vector.shape_cast %35 : vector<8x32xf32> to vector<8x4x8xf32>
    %37 = tpu.transpose %36, [1, 0, 2] : vector<8x4x8xf32> -> vector<4x8x8xf32>
    %38 = vector.extract_strided_slice %34 {offsets = [0, 32], sizes = [8, 32], strides = [1, 1]} : vector<8x96xf32> to vector<8x32xf32>
    %39 = vector.shape_cast %38 : vector<8x32xf32> to vector<8x4x8xf32>
    %40 = tpu.transpose %39, [1, 0, 2] : vector<8x4x8xf32> -> vector<4x8x8xf32>
    %41 = vector.extract_strided_slice %34 {offsets = [0, 64], sizes = [8, 32], strides = [1, 1]} : vector<8x96xf32> to vector<8x32xf32>
    %42 = vector.shape_cast %41 : vector<8x32xf32> to vector<8x4x8xf32>
    %43 = tpu.transpose %42, [1, 0, 2] : vector<8x4x8xf32> -> vector<4x8x8xf32>
    %44 = arith.truncf %37 : vector<4x8x8xf32> to vector<4x8x8xbf16>
    %45 = arith.truncf %40 : vector<4x8x8xf32> to vector<4x8x8xbf16>
    "tpu.trace_start"() <{level = 10 : i32, message = "hqd,hkd->hqk"}> : () -> ()
    %cst_17 = arith.constant dense<0.000000e+00> : vector<4x8x8xf32>
    %46 = tpu.matmul %44, %45, %cst_17 {dimension_numbers = #tpu.dot_dimension_numbers<[2], [2], [1], [1], [0, 0, 0, 1, 1, 1], [0], [0]>} : vector<4x8x8xbf16>, vector<4x8x8xbf16>, vector<4x8x8xf32> -> vector<4x8x8xf32>
    "tpu.trace_stop"() : () -> ()
    %cst_18 = arith.constant 0.353553385 : f32
    %47 = vector.broadcast %cst_18 : f32 to vector<4x8x8xf32>
    %48 = arith.mulf %46, %47 : vector<4x8x8xf32>
    %49 = tpu.iota {dimensions = array<i32: 0>} : vector<8x8xi32>
    %50 = tpu.iota {dimensions = array<i32: 1>} : vector<8x8xi32>
    %51 = arith.cmpi sge, %49, %50 : vector<8x8xi32>
    %52 = vector.shape_cast %51 : vector<8x8xi1> to vector<1x8x8xi1>
    %cst_19 = arith.constant -1.000000e+30 : f32
    %53 = vector.shape_cast %52 : vector<1x8x8xi1> to vector<1x8x8xi1>
    %54 = vector.broadcast %53 : vector<1x8x8xi1> to vector<4x8x8xi1>
    %55 = vector.broadcast %cst_19 : f32 to vector<4x8x8xf32>
    %56 = arith.select %54, %48, %55 : vector<4x8x8xi1>, vector<4x8x8xf32>
    %cst_20 = arith.constant dense<0xFF800000> : vector<4x8xf32>
    %57 = vector.multi_reduction <maximumf>, %56, %cst_20 [2] : vector<4x8x8xf32> to vector<4x8xf32>
    %58 = vector.shape_cast %57 : vector<4x8xf32> to vector<4x8x1xf32>
    %59 = vector.broadcast %58 : vector<4x8x1xf32> to vector<4x8x8xf32>
    %60 = arith.subf %56, %59 : vector<4x8x8xf32>
    %61 = math.exp %60 : vector<4x8x8xf32>
    %cst_21 = arith.constant dense<0.000000e+00> : vector<4x8xf32>
    %62 = vector.multi_reduction <add>, %61, %cst_21 [2] : vector<4x8x8xf32> to vector<4x8xf32>
    %63 = vector.shape_cast %62 : vector<4x8xf32> to vector<4x8x1xf32>
    %64 = tpu.reciprocal %63 {approx = true} : vector<4x8x1xf32> -> vector<4x8x1xf32>
    %65 = vector.broadcast %64 : vector<4x8x1xf32> to vector<4x8x8xf32>
    %66 = arith.mulf %61, %65 : vector<4x8x8xf32>
    %67 = arith.truncf %66 : vector<4x8x8xf32> to vector<4x8x8xbf16>
    %68 = arith.truncf %43 : vector<4x8x8xf32> to vector<4x8x8xbf16>
    "tpu.trace_start"() <{level = 10 : i32, message = "hqk,hkd->hqd"}> : () -> ()
    %cst_22 = arith.constant dense<0.000000e+00> : vector<4x8x8xf32>
    %69 = tpu.matmul %67, %68, %cst_22 {dimension_numbers = #tpu.dot_dimension_numbers<[2], [1], [1], [2], [0, 0, 0, 1, 1, 2], [0], [0]>} : vector<4x8x8xbf16>, vector<4x8x8xbf16>, vector<4x8x8xf32> -> vector<4x8x8xf32>
    "tpu.trace_stop"() : () -> ()
    %70 = tpu.transpose %69, [1, 0, 2] : vector<4x8x8xf32> -> vector<8x4x8xf32>
    %71 = vector.shape_cast %70 : vector<8x4x8xf32> to vector<8x32xf32>
    %72 = arith.truncf %71 : vector<8x32xf32> to vector<8x32xbf16>
    %c0_23 = arith.constant 0 : index
    %c0_24 = arith.constant 0 : index
    %c0_25 = arith.constant 0 : index
    %73 = vector.load %arg6[%c0_23, %c0_24, %c0_25] : memref<1x32x32xbf16, #tpu.memory_space<vmem>>, vector<1x32x32xbf16>
    %74 = vector.shape_cast %73 : vector<1x32x32xbf16> to vector<32x32xbf16>
    %cst_26 = arith.constant dense<0.000000e+00> : vector<8x32xf32>
    %75 = tpu.matmul %72, %74, %cst_26 {dimension_numbers = #tpu.dot_dimension_numbers<[1], [0], [0], [1], [0, 0, 1, 1], [], []>} : vector<8x32xbf16>, vector<32x32xbf16>, vector<8x32xf32> -> vector<8x32xf32>
    %c0_27 = arith.constant 0 : index
    %c0_28 = arith.constant 0 : index
    %c0_29 = arith.constant 0 : index
    %76 = vector.load %arg7[%c0_27, %c0_28, %c0_29] : memref<1x1x32xf32, #tpu.memory_space<vmem>>, vector<1x1x32xf32>
    %77 = vector.shape_cast %76 : vector<1x1x32xf32> to vector<1x32xf32>
    %78 = vector.broadcast %77 : vector<1x32xf32> to vector<8x32xf32>
    %79 = arith.addf %75, %78 : vector<8x32xf32>
    %80 = arith.addf %4, %79 : vector<8x32xf32>
    %c0_30 = arith.constant 0 : index
    %c0_31 = arith.constant 0 : index
    %c0_32 = arith.constant 0 : index
    %81 = vector.load %arg8[%c0_30, %c0_31, %c0_32] : memref<1x1x32xf32, #tpu.memory_space<vmem>>, vector<1x1x32xf32>
    %82 = vector.shape_cast %81 : vector<1x1x32xf32> to vector<1x32xf32>
    %c0_33 = arith.constant 0 : index
    %c0_34 = arith.constant 0 : index
    %c0_35 = arith.constant 0 : index
    %83 = vector.load %arg9[%c0_33, %c0_34, %c0_35] : memref<1x1x32xf32, #tpu.memory_space<vmem>>, vector<1x1x32xf32>
    %84 = vector.shape_cast %83 : vector<1x1x32xf32> to vector<1x32xf32>
    %cst_36 = arith.constant dense<0.000000e+00> : vector<8xf32>
    %85 = vector.multi_reduction <add>, %80, %cst_36 [1] : vector<8x32xf32> to vector<8xf32>
    %86 = vector.shape_cast %85 : vector<8xf32> to vector<8x1xf32>
    %cst_37 = arith.constant 3.200000e+01 : f32
    %87 = vector.broadcast %cst_37 : f32 to vector<8x1xf32>
    %88 = arith.divf %86, %87 : vector<8x1xf32>
    %89 = vector.broadcast %88 : vector<8x1xf32> to vector<8x32xf32>
    %90 = arith.subf %80, %89 : vector<8x32xf32>
    %91 = arith.mulf %90, %90 : vector<8x32xf32>
    %cst_38 = arith.constant dense<0.000000e+00> : vector<8xf32>
    %92 = vector.multi_reduction <add>, %91, %cst_38 [1] : vector<8x32xf32> to vector<8xf32>
    %93 = vector.shape_cast %92 : vector<8xf32> to vector<8x1xf32>
    %cst_39 = arith.constant 3.200000e+01 : f32
    %94 = vector.broadcast %cst_39 : f32 to vector<8x1xf32>
    %95 = arith.divf %93, %94 : vector<8x1xf32>
    %96 = vector.broadcast %88 : vector<8x1xf32> to vector<8x32xf32>
    %97 = arith.subf %80, %96 : vector<8x32xf32>
    %cst_40 = arith.constant 9.99999974E-6 : f32
    %98 = vector.broadcast %cst_40 : f32 to vector<8x1xf32>
    %99 = arith.addf %95, %98 : vector<8x1xf32>
    %100 = math.rsqrt %99 : vector<8x1xf32>
    %101 = vector.broadcast %100 : vector<8x1xf32> to vector<8x32xf32>
    %102 = arith.mulf %97, %101 : vector<8x32xf32>
    %103 = vector.broadcast %82 : vector<1x32xf32> to vector<8x32xf32>
    %104 = arith.mulf %102, %103 : vector<8x32xf32>
    %105 = vector.broadcast %84 : vector<1x32xf32> to vector<8x32xf32>
    %106 = arith.addf %104, %105 : vector<8x32xf32>
    %107 = arith.truncf %106 : vector<8x32xf32> to vector<8x32xbf16>
    %c0_41 = arith.constant 0 : index
    %c0_42 = arith.constant 0 : index
    %c0_43 = arith.constant 0 : index
    %108 = vector.load %arg10[%c0_41, %c0_42, %c0_43] : memref<1x32x128xbf16, #tpu.memory_space<vmem>>, vector<1x32x128xbf16>
    %109 = vector.shape_cast %108 : vector<1x32x128xbf16> to vector<32x128xbf16>
    %cst_44 = arith.constant dense<0.000000e+00> : vector<8x128xf32>
    %110 = tpu.matmul %107, %109, %cst_44 {dimension_numbers = #tpu.dot_dimension_numbers<[1], [0], [0], [1], [0, 0, 1, 1], [], []>} : vector<8x32xbf16>, vector<32x128xbf16>, vector<8x128xf32> -> vector<8x128xf32>
    %c0_45 = arith.constant 0 : index
    %c0_46 = arith.constant 0 : index
    %c0_47 = arith.constant 0 : index
    %111 = vector.load %arg11[%c0_45, %c0_46, %c0_47] : memref<1x1x128xf32, #tpu.memory_space<vmem>>, vector<1x1x128xf32>
    %112 = vector.shape_cast %111 : vector<1x1x128xf32> to vector<1x128xf32>
    %113 = vector.broadcast %112 : vector<1x128xf32> to vector<8x128xf32>
    %114 = arith.addf %110, %113 : vector<8x128xf32>
    %cst_48 = arith.constant 5.000000e-01 : f32
    %115 = vector.broadcast %cst_48 : f32 to vector<8x128xf32>
    %116 = arith.mulf %115, %114 : vector<8x128xf32>
    %cst_49 = arith.constant 4.471500e-02 : f32
    %117 = vector.broadcast %cst_49 : f32 to vector<8x128xf32>
    %118 = arith.mulf %117, %114 : vector<8x128xf32>
    %119 = arith.mulf %118, %114 : vector<8x128xf32>
    %120 = arith.mulf %119, %114 : vector<8x128xf32>
    %121 = arith.addf %114, %120 : vector<8x128xf32>
    %cst_50 = arith.constant 0.797884583 : f32
    %122 = vector.broadcast %cst_50 : f32 to vector<8x128xf32>
    %123 = arith.mulf %122, %121 : vector<8x128xf32>
    %124 = math.tanh %123 : vector<8x128xf32>
    %cst_51 = arith.constant 1.000000e+00 : f32
    %125 = vector.broadcast %cst_51 : f32 to vector<8x128xf32>
    %126 = arith.addf %125, %124 : vector<8x128xf32>
    %127 = arith.mulf %116, %126 : vector<8x128xf32>
    %128 = arith.truncf %127 : vector<8x128xf32> to vector<8x128xbf16>
    %c0_52 = arith.constant 0 : index
    %c0_53 = arith.constant 0 : index
    %c0_54 = arith.constant 0 : index
    %129 = vector.load %arg12[%c0_52, %c0_53, %c0_54] : memref<1x128x32xbf16, #tpu.memory_space<vmem>>, vector<1x128x32xbf16>
    %130 = vector.shape_cast %129 : vector<1x128x32xbf16> to vector<128x32xbf16>
    %cst_55 = arith.constant dense<0.000000e+00> : vector<8x32xf32>
    %131 = tpu.matmul %128, %130, %cst_55 {dimension_numbers = #tpu.dot_dimension_numbers<[1], [0], [0], [1], [0, 0, 1, 1], [], []>} : vector<8x128xbf16>, vector<128x32xbf16>, vector<8x32xf32> -> vector<8x32xf32>
    %c0_56 = arith.constant 0 : index
    %c0_57 = arith.constant 0 : index
    %c0_58 = arith.constant 0 : index
    %132 = vector.load %arg13[%c0_56, %c0_57, %c0_58] : memref<1x1x32xf32, #tpu.memory_space<vmem>>, vector<1x1x32xf32>
    %133 = vector.shape_cast %132 : vector<1x1x32xf32> to vector<1x32xf32>
    %134 = vector.broadcast %133 : vector<1x32xf32> to vector<8x32xf32>
    %135 = arith.addf %131, %134 : vector<8x32xf32>
    %136 = arith.addf %80, %135 : vector<8x32xf32>
    %c0_59 = arith.constant 0 : index
    %c0_60 = arith.constant 0 : index
    %c0_61 = arith.constant 0 : index
    %137 = vector.load %arg14[%c0_59, %c0_60, %c0_61] : memref<1x8x32xf32, #tpu.memory_space<vmem>>, vector<1x8x32xf32>
    %138 = vector.shape_cast %137 : vector<1x8x32xf32> to vector<8x32xf32>
    %139 = vector.shape_cast %136 : vector<8x32xf32> to vector<1x8x32xf32>
    tpu.vector_store %arg14[%c0_59, %c0_60, %c0_61], %139 {strides = array<i32>} : memref<1x8x32xf32, #tpu.memory_space<vmem>>, vector<1x8x32xf32>,
    return
  }
  func.func @transform_0(%arg0: i32, %arg1: i32) -> (i32, i32, i32) {
    %c0_i32 = arith.constant 0 : i32
    %c0_i32_0 = arith.constant 0 : i32
    %c0_i32_1 = arith.constant 0 : i32
    return %arg0, %c0_i32, %c0_i32_0 : i32, i32, i32
  }
  func.func @transform_1(%arg0: i32, %arg1: i32) -> (i32, i32, i32) {
    %c0_i32 = arith.constant 0 : i32
    %c0_i32_0 = arith.constant 0 : i32
    %c0_i32_1 = arith.constant 0 : i32
    return %arg1, %c0_i32, %c0_i32_0 : i32, i32, i32
  }
  func.func @transform_2(%arg0: i32, %arg1: i32) -> (i32, i32, i32) {
    %c0_i32 = arith.constant 0 : i32
    %c0_i32_0 = arith.constant 0 : i32
    %c0_i32_1 = arith.constant 0 : i32
    return %arg1, %c0_i32, %c0_i32_0 : i32, i32, i32
  }
  func.func @transform_3(%arg0: i32, %arg1: i32) -> (i32, i32, i32) {
    %c0_i32 = arith.constant 0 : i32
    %c0_i32_0 = arith.constant 0 : i32
    %c0_i32_1 = arith.constant 0 : i32
    return %arg1, %c0_i32, %c0_i32_0 : i32, i32, i32
  }
  func.func @transform_4(%arg0: i32, %arg1: i32) -> (i32, i32, i32) {
    %c0_i32 = arith.constant 0 : i32
    %c0_i32_0 = arith.constant 0 : i32
    %c0_i32_1 = arith.constant 0 : i32
    return %arg1, %c0_i32, %c0_i32_0 : i32, i32, i32
  }
  func.func @transform_5(%arg0: i32, %arg1: i32) -> (i32, i32, i32) {
    %c0_i32 = arith.constant 0 : i32
    %c0_i32_0 = arith.constant 0 : i32
    %c0_i32_1 = arith.constant 0 : i32
    return %arg1, %c0_i32, %c0_i32_0 : i32, i32, i32
  }
  func.func @transform_6(%arg0: i32, %arg1: i32) -> (i32, i32, i32) {
    %c0_i32 = arith.constant 0 : i32
    %c0_i32_0 = arith.constant 0 : i32
    %c0_i32_1 = arith.constant 0 : i32
    return %arg1, %c0_i32, %c0_i32_0 : i32, i32, i32
  }
  func.func @transform_7(%arg0: i32, %arg1: i32) -> (i32, i32, i32) {
    %c0_i32 = arith.constant 0 : i32
    %c0_i32_0 = arith.constant 0 : i32
    %c0_i32_1 = arith.constant 0 : i32
    return %arg1, %c0_i32, %c0_i32_0 : i32, i32, i32
  }
  func.func @transform_8(%arg0: i32, %arg1: i32) -> (i32, i32, i32) {
    %c0_i32 = arith.constant 0 : i32
    %c0_i32_0 = arith.constant 0 : i32
    %c0_i32_1 = arith.constant 0 : i32
    return %arg1, %c0_i32, %c0_i32_0 : i32, i32, i32
  }
  func.func @transform_9(%arg0: i32, %arg1: i32) -> (i32, i32, i32) {
    %c0_i32 = arith.constant 0 : i32
    %c0_i32_0 = arith.constant 0 : i32
    %c0_i32_1 = arith.constant 0 : i32
    return %arg1, %c0_i32, %c0_i32_0 : i32, i32, i32
  }
  func.func @transform_10(%arg0: i32, %arg1: i32) -> (i32, i32, i32) {
    %c0_i32 = arith.constant 0 : i32
    %c0_i32_0 = arith.constant 0 : i32
    %c0_i32_1 = arith.constant 0 : i32
    return %arg1, %c0_i32, %c0_i32_0 : i32, i32, i32
  }
  func.func @transform_11(%arg0: i32, %arg1: i32) -> (i32, i32, i32) {
    %c0_i32 = arith.constant 0 : i32
    %c0_i32_0 = arith.constant 0 : i32
    %c0_i32_1 = arith.constant 0 : i32
    return %arg1, %c0_i32, %c0_i32_0 : i32, i32, i32
  }
  func.func @transform_12(%arg0: i32, %arg1: i32) -> (i32, i32, i32) {
    %c0_i32 = arith.constant 0 : i32
    %c0_i32_0 = arith.constant 0 : i32
    %c0_i32_1 = arith.constant 0 : i32
    return %arg0, %c0_i32, %c0_i32_0 : i32, i32, i32
  }
}

</mosaic_0001>

<llo_original>
// kernel: tpu_custom_call.1
$region0: #{tpu_custom_call.1}
  #allocation0 [shape = 'u32[]', space=smem, size = 0x4, offset = 0x4, fixed_abs, tag = 'smem constant byte address 0x4 - core index']
  #allocation1 [shape = 'u32[72,128]{1,0:T(1,128)}', space=vmem, size = 0x9000, scoped, tag = 'internal scratch']
  %s0 = inlined_call_operand.vmem [shape: f32[2,8,32], index: 0, kind: input, shape index: {}]
  %s1 = inlined_call_operand.vmem [shape: f32[2,1,32], index: 1, kind: input, shape index: {}]
  %s2 = inlined_call_operand.vmem [shape: f32[2,1,32], index: 2, kind: input, shape index: {}]
  %s3 = inlined_call_operand.vmem [shape: bf16[2,32,96], index: 3, kind: input, shape index: {}]
  %s4 = inlined_call_operand.vmem [shape: bf16[2,32,32], index: 4, kind: input, shape index: {}]
  %s5 = inlined_call_operand.vmem [shape: f32[2,1,32], index: 5, kind: input, shape index: {}]
  %s6 = inlined_call_operand.vmem [shape: f32[2,1,32], index: 6, kind: input, shape index: {}]
  %s7 = inlined_call_operand.vmem [shape: f32[2,1,32], index: 7, kind: input, shape index: {}]
  %s8 = inlined_call_operand.vmem [shape: bf16[2,32,128], index: 8, kind: input, shape index: {}]
  %s9 = inlined_call_operand.vmem [shape: f32[2,1,128], index: 9, kind: input, shape index: {}]
  %s10 = inlined_call_operand.vmem [shape: bf16[2,128,32], index: 10, kind: input, shape index: {}]
  %s11 = inlined_call_operand.vmem [shape: f32[2,1,32], index: 11, kind: input, shape index: {}]
  %s12 = inlined_call_operand.hbm [shape: f32[2,8,32], index: 12, kind: output, shape index: {}]
  %s13 = sld [smem:[#allocation0]]
  $region85: #{tpu_custom_call.1} parent=0
    _
  %s15 = ssub.s32 1, %s13
  %s16 = scalar_select 0, %s15, %s13
  $region1: #{tpu_custom_call.1} parent=0
    #allocation2 [shape = 'u8[8192]{0}', space=vmem, size = 0x2000, scoped, tag = 'output window, operand 0']
    #allocation3 [shape = 's32[2]{0}', space=sflag, size = 0x8, scoped, tag = 'scoped memory for tpu_custom_call.1']
    %17 = vsyncpa [#allocation3], 0
    %s18 = scalar_lea.sflag [#allocation3], 1
    %19 = vsyncpa %s18, 0
    loop: start=0, step=1, limit=6
    $region2: #{tpu_custom_call.1} parent=1 // loop_pre_header
      _
    $region3: #{tpu_custom_call.1} parent=1 // loop_header
      %s21 = sphi 0, %s25
      %p22 = scmp.ge.s32.totalorder %s21, 6
      %s28 = sphi 0, %s40
      %s29 = sphi 0, %s36
      %s30 = sphi 0, %s28
      %s31 = sphi 0, %s29
      %s32 = sphi 0, %s30
      %s33 = sphi 0, %s31
      %s43 = sphi 0, %s45
      %s46 = sphi 0, %s43
      %s47 = sphi 0, %s46
      %s63 = sphi 0, %s47
      %s69 = sphi 0, %s71
      %s72 = sphi 0, %s69
      %s73 = sphi 0, %s72
      %s89 = sphi 0, %s73
      %s95 = sphi 0, %s97
      %s98 = sphi 0, %s95
      %s99 = sphi 0, %s98
      %s115 = sphi 0, %s99
      %s121 = sphi 0, %s123
      %s124 = sphi 0, %s121
      %s125 = sphi 0, %s124
      %s141 = sphi 0, %s125
      %s147 = sphi 0, %s149
      %s150 = sphi 0, %s147
      %s151 = sphi 0, %s150
      %s167 = sphi 0, %s151
      %s173 = sphi 0, %s175
      %s176 = sphi 0, %s173
      %s177 = sphi 0, %s176
      %s193 = sphi 0, %s177
      %s199 = sphi 0, %s201
      %s202 = sphi 0, %s199
      %s203 = sphi 0, %s202
      %s219 = sphi 0, %s203
      %s225 = sphi 0, %s227
      %s228 = sphi 0, %s225
      %s229 = sphi 0, %s228
      %s245 = sphi 0, %s229
      %s251 = sphi 0, %s253
      %s254 = sphi 0, %s251
      %s255 = sphi 0, %s254
      %s271 = sphi 0, %s255
      %s277 = sphi 0, %s279
      %s280 = sphi 0, %s277
      %s281 = sphi 0, %s280
      %s297 = sphi 0, %s281
      %s303 = sphi 0, %s305
      %s306 = sphi 0, %s303
      %s307 = sphi 0, %s306
      %s323 = sphi 0, %s307
      %s329 = sphi 0, %s331
      %s332 = sphi 0, %s329
      %s333 = sphi 0, %s332
      %s349 = sphi 0, %s333
      %s355 = sphi 0, %s357
      %s358 = sphi 0, %s355
      %s359 = sphi 0, %s358
      %s375 = sphi 0, %s359
    $region4: #{tpu_custom_call.1} parent=1 // loop_header_branch
      %24 = sbr.rel (%p22) target = $region8
    $region5: #{tpu_custom_call.1} parent=1 // loop_body
      %s26 = ssub.s32 %s21, 1
      %s27 = ssub.s32 %s21, 2
      %s34 = sadd.s32 1, %s29
      %p35 = scmp.ge.s32.totalorder %s34, 2
      %s36 = scalar_select %p35, 0, %s34
      %s37 = sadd.s32 1, %s28
      %s38 = scalar_select %p35, %s37, %s28
      %p39 = scmp.ge.s32.totalorder %s38, 2
      %s40 = scalar_select %p39, 0, %s38
      %s41 = ssub.s32 %s28, %s40
      %p42 = scmp.eq.s32.totalorder %s41, 0
      %s44 = sadd.s32 %s43, 1
      %s45 = scalar_select %p42, %s43, %s44
      %p48 = pneg %p42
      %p49 = scmp.eq.s32.totalorder %s21, 3
      %p50 = por %p48, %p49
      %p51 = scmp.ne.s32.totalorder %s43, %s46
      %p52 = scmp.eq.s32.totalorder %s21, 0
      %p53 = por %p51, %p52
      %p54 = scmp.ne.s32.totalorder %s43, %s46
      %p55 = scmp.eq.s32.totalorder %s26, 3
      %p56 = por %p54, %p55
      %p57 = scmp.ne.s32.totalorder %s46, %s47
      %p58 = scmp.eq.s32.totalorder %s26, 0
      %p59 = por %p57, %p58
      %p60 = scmp.ne.s32.totalorder %s46, %s47
      %p61 = scmp.eq.s32.totalorder %s27, 3
      %p62 = por %p60, %p61
      %p64 = scmp.ne.s32.totalorder %s47, %s63
      %p65 = scmp.eq.s32.totalorder %s27, 0
      %p66 = por %p64, %p65
      %s67 = ssub.s32 %s29, %s36
      %p68 = scmp.eq.s32.totalorder %s67, 0
      %s70 = sadd.s32 %s69, 1
      %s71 = scalar_select %p68, %s69, %s70
      %p74 = pneg %p68
      %p75 = scmp.eq.s32.totalorder %s21, 3
      %p76 = por %p74, %p75
      %p77 = scmp.ne.s32.totalorder %s69, %s72
      %p78 = scmp.eq.s32.totalorder %s21, 0
      %p79 = por %p77, %p78
      %p80 = scmp.ne.s32.totalorder %s69, %s72
      %p81 = scmp.eq.s32.totalorder %s26, 3
      %p82 = por %p80, %p81
      %p83 = scmp.ne.s32.totalorder %s72, %s73
      %p84 = scmp.eq.s32.totalorder %s26, 0
      %p85 = por %p83, %p84
      %p86 = scmp.ne.s32.totalorder %s72, %s73
      %p87 = scmp.eq.s32.totalorder %s27, 3
      %p88 = por %p86, %p87
      %p90 = scmp.ne.s32.totalorder %s73, %s89
      %p91 = scmp.eq.s32.totalorder %s27, 0
      %p92 = por %p90, %p91
      %s93 = ssub.s32 %s29, %s36
      %p94 = scmp.eq.s32.totalorder %s93, 0
      %s96 = sadd.s32 %s95, 1
      %s97 = scalar_select %p94, %s95, %s96
      %p100 = pneg %p94
      %p101 = scmp.eq.s32.totalorder %s21, 3
      %p102 = por %p100, %p101
      %p103 = scmp.ne.s32.totalorder %s95, %s98
      %p104 = scmp.eq.s32.totalorder %s21, 0
      %p105 = por %p103, %p104
      %p106 = scmp.ne.s32.totalorder %s95, %s98
      %p107 = scmp.eq.s32.totalorder %s26, 3
      %p108 = por %p106, %p107
      %p109 = scmp.ne.s32.totalorder %s98, %s99
      %p110 = scmp.eq.s32.totalorder %s26, 0
      %p111 = por %p109, %p110
      %p112 = scmp.ne.s32.totalorder %s98, %s99
      %p113 = scmp.eq.s32.totalorder %s27, 3
      %p114 = por %p112, %p113
      %p116 = scmp.ne.s32.totalorder %s99, %s115
      %p117 = scmp.eq.s32.totalorder %s27, 0
      %p118 = por %p116, %p117
      %s119 = ssub.s32 %s29, %s36
      %p120 = scmp.eq.s32.totalorder %s119, 0
      %s122 = sadd.s32 %s121, 1
      %s123 = scalar_select %p120, %s121, %s122
      %p126 = pneg %p120
      %p127 = scmp.eq.s32.totalorder %s21, 3
      %p128 = por %p126, %p127
      %p129 = scmp.ne.s32.totalorder %s121, %s124
      %p130 = scmp.eq.s32.totalorder %s21, 0
      %p131 = por %p129, %p130
      %p132 = scmp.ne.s32.totalorder %s121, %s124
      %p133 = scmp.eq.s32.totalorder %s26, 3
      %p134 = por %p132, %p133
      %p135 = scmp.ne.s32.totalorder %s124, %s125
      %p136 = scmp.eq.s32.totalorder %s26, 0
      %p137 = por %p135, %p136
      %p138 = scmp.ne.s32.totalorder %s124, %s125
      %p139 = scmp.eq.s32.totalorder %s27, 3
      %p140 = por %p138, %p139
      %p142 = scmp.ne.s32.totalorder %s125, %s141
      %p143 = scmp.eq.s32.totalorder %s27, 0
      %p144 = por %p142, %p143
      %s145 = ssub.s32 %s29, %s36
      %p146 = scmp.eq.s32.totalorder %s145, 0
      %s148 = sadd.s32 %s147, 1
      %s149 = scalar_select %p146, %s147, %s148
      %p152 = pneg %p146
      %p153 = scmp.eq.s32.totalorder %s21, 3
      %p154 = por %p152, %p153
      %p155 = scmp.ne.s32.totalorder %s147, %s150
      %p156 = scmp.eq.s32.totalorder %s21, 0
      %p157 = por %p155, %p156
      %p158 = scmp.ne.s32.totalorder %s147, %s150
      %p159 = scmp.eq.s32.totalorder %s26, 3
      %p160 = por %p158, %p159
      %p161 = scmp.ne.s32.totalorder %s150, %s151
      %p162 = scmp.eq.s32.totalorder %s26, 0
      %p163 = por %p161, %p162
      %p164 = scmp.ne.s32.totalorder %s150, %s151
      %p165 = scmp.eq.s32.totalorder %s27, 3
      %p166 = por %p164, %p165
      %p168 = scmp.ne.s32.totalorder %s151, %s167
      %p169 = scmp.eq.s32.totalorder %s27, 0
      %p170 = por %p168, %p169
      %s171 = ssub.s32 %s29, %s36
      %p172 = scmp.eq.s32.totalorder %s171, 0
      %s174 = sadd.s32 %s173, 1
      %s175 = scalar_select %p172, %s173, %s174
      %p178 = pneg %p172
      %p179 = scmp.eq.s32.totalorder %s21, 3
      %p180 = por %p178, %p179
      %p181 = scmp.ne.s32.totalorder %s173, %s176
      %p182 = scmp.eq.s32.totalorder %s21, 0
      %p183 = por %p181, %p182
      %p184 = scmp.ne.s32.totalorder %s173, %s176
      %p185 = scmp.eq.s32.totalorder %s26, 3
      %p186 = por %p184, %p185
      %p187 = scmp.ne.s32.totalorder %s176, %s177
      %p188 = scmp.eq.s32.totalorder %s26, 0
      %p189 = por %p187, %p188
      %p190 = scmp.ne.s32.totalorder %s176, %s177
      %p191 = scmp.eq.s32.totalorder %s27, 3
      %p192 = por %p190, %p191
      %p194 = scmp.ne.s32.totalorder %s177, %s193
      %p195 = scmp.eq.s32.totalorder %s27, 0
      %p196 = por %p194, %p195
      %s197 = ssub.s32 %s29, %s36
      %p198 = scmp.eq.s32.totalorder %s197, 0
      %s200 = sadd.s32 %s199, 1
      %s201 = scalar_select %p198, %s199, %s200
      %p204 = pneg %p198
      %p205 = scmp.eq.s32.totalorder %s21, 3
      %p206 = por %p204, %p205
      %p207 = scmp.ne.s32.totalorder %s199, %s202
      %p208 = scmp.eq.s32.totalorder %s21, 0
      %p209 = por %p207, %p208
      %p210 = scmp.ne.s32.totalorder %s199, %s202
      %p211 = scmp.eq.s32.totalorder %s26, 3
      %p212 = por %p210, %p211
      %p213 = scmp.ne.s32.totalorder %s202, %s203
      %p214 = scmp.eq.s32.totalorder %s26, 0
      %p215 = por %p213, %p214
      %p216 = scmp.ne.s32.totalorder %s202, %s203
      %p217 = scmp.eq.s32.totalorder %s27, 3
      %p218 = por %p216, %p217
      %p220 = scmp.ne.s32.totalorder %s203, %s219
      %p221 = scmp.eq.s32.totalorder %s27, 0
      %p222 = por %p220, %p221
      %s223 = ssub.s32 %s29, %s36
      %p224 = scmp.eq.s32.totalorder %s223, 0
      %s226 = sadd.s32 %s225, 1
      %s227 = scalar_select %p224, %s225, %s226
      %p230 = pneg %p224
      %p231 = scmp.eq.s32.totalorder %s21, 3
      %p232 = por %p230, %p231
      %p233 = scmp.ne.s32.totalorder %s225, %s228
      %p234 = scmp.eq.s32.totalorder %s21, 0
      %p235 = por %p233, %p234
      %p236 = scmp.ne.s32.totalorder %s225, %s228
      %p237 = scmp.eq.s32.totalorder %s26, 3
      %p238 = por %p236, %p237
      %p239 = scmp.ne.s32.totalorder %s228, %s229
      %p240 = scmp.eq.s32.totalorder %s26, 0
      %p241 = por %p239, %p240
      %p242 = scmp.ne.s32.totalorder %s228, %s229
      %p243 = scmp.eq.s32.totalorder %s27, 3
      %p244 = por %p242, %p243
      %p246 = scmp.ne.s32.totalorder %s229, %s245
      %p247 = scmp.eq.s32.totalorder %s27, 0
      %p248 = por %p246, %p247
      %s249 = ssub.s32 %s29, %s36
      %p250 = scmp.eq.s32.totalorder %s249, 0
      %s252 = sadd.s32 %s251, 1
      %s253 = scalar_select %p250, %s251, %s252
      %p256 = pneg %p250
      %p257 = scmp.eq.s32.totalorder %s21, 3
      %p258 = por %p256, %p257
      %p259 = scmp.ne.s32.totalorder %s251, %s254
      %p260 = scmp.eq.s32.totalorder %s21, 0
      %p261 = por %p259, %p260
      %p262 = scmp.ne.s32.totalorder %s251, %s254
      %p263 = scmp.eq.s32.totalorder %s26, 3
      %p264 = por %p262, %p263
      %p265 = scmp.ne.s32.totalorder %s254, %s255
      %p266 = scmp.eq.s32.totalorder %s26, 0
      %p267 = por %p265, %p266
      %p268 = scmp.ne.s32.totalorder %s254, %s255
      %p269 = scmp.eq.s32.totalorder %s27, 3
      %p270 = por %p268, %p269
      %p272 = scmp.ne.s32.totalorder %s255, %s271
      %p273 = scmp.eq.s32.totalorder %s27, 0
      %p274 = por %p272, %p273
      %s275 = ssub.s32 %s29, %s36
      %p276 = scmp.eq.s32.totalorder %s275, 0
      %s278 = sadd.s32 %s277, 1
      %s279 = scalar_select %p276, %s277, %s278
      %p282 = pneg %p276
      %p283 = scmp.eq.s32.totalorder %s21, 3
      %p284 = por %p282, %p283
      %p285 = scmp.ne.s32.totalorder %s277, %s280
      %p286 = scmp.eq.s32.totalorder %s21, 0
      %p287 = por %p285, %p286
      %p288 = scmp.ne.s32.totalorder %s277, %s280
      %p289 = scmp.eq.s32.totalorder %s26, 3
      %p290 = por %p288, %p289
      %p291 = scmp.ne.s32.totalorder %s280, %s281
      %p292 = scmp.eq.s32.totalorder %s26, 0
      %p293 = por %p291, %p292
      %p294 = scmp.ne.s32.totalorder %s280, %s281
      %p295 = scmp.eq.s32.totalorder %s27, 3
      %p296 = por %p294, %p295
      %p298 = scmp.ne.s32.totalorder %s281, %s297
      %p299 = scmp.eq.s32.totalorder %s27, 0
      %p300 = por %p298, %p299
      %s301 = ssub.s32 %s29, %s36
      %p302 = scmp.eq.s32.totalorder %s301, 0
      %s304 = sadd.s32 %s303, 1
      %s305 = scalar_select %p302, %s303, %s304
      %p308 = pneg %p302
      %p309 = scmp.eq.s32.totalorder %s21, 3
      %p310 = por %p308, %p309
      %p311 = scmp.ne.s32.totalorder %s303, %s306
      %p312 = scmp.eq.s32.totalorder %s21, 0
      %p313 = por %p311, %p312
      %p314 = scmp.ne.s32.totalorder %s303, %s306
      %p315 = scmp.eq.s32.totalorder %s26, 3
      %p316 = por %p314, %p315
      %p317 = scmp.ne.s32.totalorder %s306, %s307
      %p318 = scmp.eq.s32.totalorder %s26, 0
      %p319 = por %p317, %p318
      %p320 = scmp.ne.s32.totalorder %s306, %s307
      %p321 = scmp.eq.s32.totalorder %s27, 3
      %p322 = por %p320, %p321
      %p324 = scmp.ne.s32.totalorder %s307, %s323
      %p325 = scmp.eq.s32.totalorder %s27, 0
      %p326 = por %p324, %p325
      %s327 = ssub.s32 %s29, %s36
      %p328 = scmp.eq.s32.totalorder %s327, 0
      %s330 = sadd.s32 %s329, 1
      %s331 = scalar_select %p328, %s329, %s330
      %p334 = pneg %p328
      %p335 = scmp.eq.s32.totalorder %s21, 3
      %p336 = por %p334, %p335
      %p337 = scmp.ne.s32.totalorder %s329, %s332
      %p338 = scmp.eq.s32.totalorder %s21, 0
      %p339 = por %p337, %p338
      %p340 = scmp.ne.s32.totalorder %s329, %s332
      %p341 = scmp.eq.s32.totalorder %s26, 3
      %p342 = por %p340, %p341
      %p343 = scmp.ne.s32.totalorder %s332, %s333
      %p344 = scmp.eq.s32.totalorder %s26, 0
      %p345 = por %p343, %p344
      %p346 = scmp.ne.s32.totalorder %s332, %s333
      %p347 = scmp.eq.s32.totalorder %s27, 3
      %p348 = por %p346, %p347
      %p350 = scmp.ne.s32.totalorder %s333, %s349
      %p351 = scmp.eq.s32.totalorder %s27, 0
      %p352 = por %p350, %p351
      %s353 = ssub.s32 %s28, %s40
      %p354 = scmp.eq.s32.totalorder %s353, 0
      %s356 = sadd.s32 %s355, 1
      %s357 = scalar_select %p354, %s355, %s356
      %p360 = pneg %p354
      %p361 = scmp.eq.s32.totalorder %s21, 3
      %p362 = por %p360, %p361
      %p363 = scmp.ne.s32.totalorder %s355, %s358
      %p364 = scmp.eq.s32.totalorder %s21, 0
      %p365 = por %p363, %p364
      %p366 = scmp.ne.s32.totalorder %s355, %s358
      %p367 = scmp.eq.s32.totalorder %s26, 3
      %p368 = por %p366, %p367
      %p369 = scmp.ne.s32.totalorder %s358, %s359
      %p370 = scmp.eq.s32.totalorder %s26, 0
      %p371 = por %p369, %p370
      %p372 = scmp.ne.s32.totalorder %s358, %s359
      %p373 = scmp.eq.s32.totalorder %s27, 3
      %p374 = por %p372, %p373
      %p376 = scmp.ne.s32.totalorder %s359, %s375
      %p377 = scmp.eq.s32.totalorder %s27, 0
      %p378 = por %p376, %p377
      %p379 = scmp.le.s32.totalorder 1, %s21
      %p380 = scmp.lt.s32.totalorder %s21, 5
      %p381 = pnand %p379, %p380
      %p382 = pneg %p381
      // Predicated region
      $region9: #{tpu_custom_call.1} parent=5 // pred_check
        _
      $region10: #{tpu_custom_call.1} parent=5 // pred_check_branch
        %384 = sbr.rel (%p381) target = $region12
      $region11: #{tpu_custom_call.1} parent=5 // pred_region
        %s385 = ssub.s32 %s21, 1
      $region12: #{tpu_custom_call.1} parent=5 // pred_fallthru
        _
      %p386 = scmp.lt.s32.totalorder %s21, 4
      // Predicated region
      $region13: #{tpu_custom_call.1} parent=5 // pred_check
        %p387 = pneg %p386
      $region14: #{tpu_custom_call.1} parent=5 // pred_check_branch
        %389 = sbr.rel (%p387) target = $region16
      $region15: #{tpu_custom_call.1} parent=5 // pred_region
        // Predicated region
        $region17: #{tpu_custom_call.1} parent=15 // pred_check
          %p390 = pneg %p53
        $region18: #{tpu_custom_call.1} parent=15 // pred_check_branch
          %392 = sbr.rel (%p390) target = $region20
        $region19: #{tpu_custom_call.1} parent=15 // pred_region
          %p393 = scmp.lt.s32.totalorder %s28, 1
          %s394 = scalar_select %p393, %s28, 1
          %s395 = smul.addr %s394, 8
          %s396 = scalar_lea.vmem %s0, %s395
        $region20: #{tpu_custom_call.1} parent=15 // pred_fallthru
          _
        // Predicated region
        $region21: #{tpu_custom_call.1} parent=15 // pred_check
          %p397 = pneg %p79
        $region22: #{tpu_custom_call.1} parent=15 // pred_check_branch
          %399 = sbr.rel (%p397) target = $region24
        $region23: #{tpu_custom_call.1} parent=15 // pred_region
          %p400 = scmp.lt.s32.totalorder %s29, 1
          %s401 = scalar_select %p400, %s29, 1
          %s402 = scalar_lea.vmem %s1, %s401
        $region24: #{tpu_custom_call.1} parent=15 // pred_fallthru
          _
        // Predicated region
        $region25: #{tpu_custom_call.1} parent=15 // pred_check
          %p403 = pneg %p105
        $region26: #{tpu_custom_call.1} parent=15 // pred_check_branch
          %405 = sbr.rel (%p403) target = $region28
        $region27: #{tpu_custom_call.1} parent=15 // pred_region
          %p406 = scmp.lt.s32.totalorder %s29, 1
          %s407 = scalar_select %p406, %s29, 1
          %s408 = scalar_lea.vmem %s2, %s407
        $region28: #{tpu_custom_call.1} parent=15 // pred_fallthru
          _
        // Predicated region
        $region29: #{tpu_custom_call.1} parent=15 // pred_check
          %p409 = pneg %p131
        $region30: #{tpu_custom_call.1} parent=15 // pred_check_branch
          %411 = sbr.rel (%p409) target = $region32
        $region31: #{tpu_custom_call.1} parent=15 // pred_region
          %p412 = scmp.lt.s32.totalorder %s29, 1
          %s413 = scalar_select %p412, %s29, 1
          %s414 = smul.addr %s413, 4
          %s415 = smul.addr %s414, 4
          %s416 = scalar_lea.vmem %s3, %s415
        $region32: #{tpu_custom_call.1} parent=15 // pred_fallthru
          _
        // Predicated region
        $region33: #{tpu_custom_call.1} parent=15 // pred_check
          %p417 = pneg %p157
        $region34: #{tpu_custom_call.1} parent=15 // pred_check_branch
          %419 = sbr.rel (%p417) target = $region36
        $region35: #{tpu_custom_call.1} parent=15 // pred_region
          %p420 = scmp.lt.s32.totalorder %s29, 1
          %s421 = scalar_select %p420, %s29, 1
          %s422 = smul.addr %s421, 4
          %s423 = smul.addr %s422, 4
          %s424 = scalar_lea.vmem %s4, %s423
        $region36: #{tpu_custom_call.1} parent=15 // pred_fallthru
          _
        // Predicated region
        $region37: #{tpu_custom_call.1} parent=15 // pred_check
          %p425 = pneg %p183
        $region38: #{tpu_custom_call.1} parent=15 // pred_check_branch
          %427 = sbr.rel (%p425) target = $region40
        $region39: #{tpu_custom_call.1} parent=15 // pred_region
          %p428 = scmp.lt.s32.totalorder %s29, 1
          %s429 = scalar_select %p428, %s29, 1
          %s430 = scalar_lea.vmem %s5, %s429
        $region40: #{tpu_custom_call.1} parent=15 // pred_fallthru
          _
        // Predicated region
        $region41: #{tpu_custom_call.1} parent=15 // pred_check
          %p431 = pneg %p209
        $region42: #{tpu_custom_call.1} parent=15 // pred_check_branch
          %433 = sbr.rel (%p431) target = $region44
        $region43: #{tpu_custom_call.1} parent=15 // pred_region
          %p434 = scmp.lt.s32.totalorder %s29, 1
          %s435 = scalar_select %p434, %s29, 1
          %s436 = scalar_lea.vmem %s6, %s435
        $region44: #{tpu_custom_call.1} parent=15 // pred_fallthru
          _
        // Predicated region
        $region45: #{tpu_custom_call.1} parent=15 // pred_check
          %p437 = pneg %p235
        $region46: #{tpu_custom_call.1} parent=15 // pred_check_branch
          %439 = sbr.rel (%p437) target = $region48
        $region47: #{tpu_custom_call.1} parent=15 // pred_region
          %p440 = scmp.lt.s32.totalorder %s29, 1
          %s441 = scalar_select %p440, %s29, 1
          %s442 = scalar_lea.vmem %s7, %s441
        $region48: #{tpu_custom_call.1} parent=15 // pred_fallthru
          _
        // Predicated region
        $region49: #{tpu_custom_call.1} parent=15 // pred_check
          %p443 = pneg %p261
        $region50: #{tpu_custom_call.1} parent=15 // pred_check_branch
          %445 = sbr.rel (%p443) target = $region52
        $region51: #{tpu_custom_call.1} parent=15 // pred_region
          %p446 = scmp.lt.s32.totalorder %s29, 1
          %s447 = scalar_select %p446, %s29, 1
          %s448 = smul.addr %s447, 4
          %s449 = smul.addr %s448, 4
          %s450 = scalar_lea.vmem %s8, %s449
        $region52: #{tpu_custom_call.1} parent=15 // pred_fallthru
          _
        // Predicated region
        $region53: #{tpu_custom_call.1} parent=15 // pred_check
          %p451 = pneg %p287
        $region54: #{tpu_custom_call.1} parent=15 // pred_check_branch
          %453 = sbr.rel (%p451) target = $region56
        $region55: #{tpu_custom_call.1} parent=15 // pred_region
          %p454 = scmp.lt.s32.totalorder %s29, 1
          %s455 = scalar_select %p454, %s29, 1
          %s456 = scalar_lea.vmem %s9, %s455
        $region56: #{tpu_custom_call.1} parent=15 // pred_fallthru
          _
        // Predicated region
        $region57: #{tpu_custom_call.1} parent=15 // pred_check
          %p457 = pneg %p313
        $region58: #{tpu_custom_call.1} parent=15 // pred_check_branch
          %459 = sbr.rel (%p457) target = $region60
        $region59: #{tpu_custom_call.1} parent=15 // pred_region
          %p460 = scmp.lt.s32.totalorder %s29, 1
          %s461 = scalar_select %p460, %s29, 1
          %s462 = smul.addr %s461, 16
          %s463 = smul.addr %s462, 4
          %s464 = scalar_lea.vmem %s10, %s463
        $region60: #{tpu_custom_call.1} parent=15 // pred_fallthru
          _
        // Predicated region
        $region61: #{tpu_custom_call.1} parent=15 // pred_check
          %p465 = pneg %p339
        $region62: #{tpu_custom_call.1} parent=15 // pred_check_branch
          %467 = sbr.rel (%p465) target = $region64
        $region63: #{tpu_custom_call.1} parent=15 // pred_region
          %p468 = scmp.lt.s32.totalorder %s29, 1
          %s469 = scalar_select %p468, %s29, 1
          %s470 = scalar_lea.vmem %s11, %s469
        $region64: #{tpu_custom_call.1} parent=15 // pred_fallthru
          _
      $region16: #{tpu_custom_call.1} parent=5 // pred_fallthru
        _
      %p471 = scmp.le.s32.totalorder 1, %s21
      %p472 = scmp.lt.s32.totalorder %s21, 5
      %p473 = pnand %p471, %p472
      %p474 = pneg %p473
      // Predicated region
      $region65: #{tpu_custom_call.1} parent=5 // pred_check
        _
      $region66: #{tpu_custom_call.1} parent=5 // pred_check_branch
        %476 = sbr.rel (%p473) target = $region68
      $region67: #{tpu_custom_call.1} parent=5 // pred_region
        %s477 = ssub.s32 %s21, 1
        %p478 = scmp.lt.s32.totalorder %s30, 1
        %s479 = scalar_select %p478, %s30, 1
        %s480 = smul.addr %s479, 8
        %s481 = scalar_lea.vmem %s0, %s480
        %p482 = pneg %p59
        %p483 = pneg %p56
        %p484 = scmp.lt.s32.totalorder %s31, 1
        %s485 = scalar_select %p484, %s31, 1
        %s486 = scalar_lea.vmem %s1, %s485
        %p487 = pneg %p85
        %p488 = pneg %p82
        %p489 = scmp.lt.s32.totalorder %s31, 1
        %s490 = scalar_select %p489, %s31, 1
        %s491 = scalar_lea.vmem %s2, %s490
        %p492 = pneg %p111
        %p493 = pneg %p108
        %p494 = scmp.lt.s32.totalorder %s31, 1
        %s495 = scalar_select %p494, %s31, 1
        %s496 = smul.addr %s495, 4
        %s497 = smul.addr %s496, 4
        %s498 = scalar_lea.vmem %s3, %s497
        %p499 = pneg %p137
        %p500 = pneg %p134
        %p501 = scmp.lt.s32.totalorder %s31, 1
        %s502 = scalar_select %p501, %s31, 1
        %s503 = smul.addr %s502, 4
        %s504 = smul.addr %s503, 4
        %s505 = scalar_lea.vmem %s4, %s504
        %p506 = pneg %p163
        %p507 = pneg %p160
        %p508 = scmp.lt.s32.totalorder %s31, 1
        %s509 = scalar_select %p508, %s31, 1
        %s510 = scalar_lea.vmem %s5, %s509
        %p511 = pneg %p189
        %p512 = pneg %p186
        %p513 = scmp.lt.s32.totalorder %s31, 1
        %s514 = scalar_select %p513, %s31, 1
        %s515 = scalar_lea.vmem %s6, %s514
        %p516 = pneg %p215
        %p517 = pneg %p212
        %p518 = scmp.lt.s32.totalorder %s31, 1
        %s519 = scalar_select %p518, %s31, 1
        %s520 = scalar_lea.vmem %s7, %s519
        %p521 = pneg %p241
        %p522 = pneg %p238
        %p523 = scmp.lt.s32.totalorder %s31, 1
        %s524 = scalar_select %p523, %s31, 1
        %s525 = smul.addr %s524, 4
        %s526 = smul.addr %s525, 4
        %s527 = scalar_lea.vmem %s8, %s526
        %p528 = pneg %p267
        %p529 = pneg %p264
        %p530 = scmp.lt.s32.totalorder %s31, 1
        %s531 = scalar_select %p530, %s31, 1
        %s532 = scalar_lea.vmem %s9, %s531
        %p533 = pneg %p293
        %p534 = pneg %p290
        %p535 = scmp.lt.s32.totalorder %s31, 1
        %s536 = scalar_select %p535, %s31, 1
        %s537 = smul.addr %s536, 16
        %s538 = smul.addr %s537, 4
        %s539 = scalar_lea.vmem %s10, %s538
        %p540 = pneg %p319
        %p541 = pneg %p316
        %p542 = scmp.lt.s32.totalorder %s31, 1
        %s543 = scalar_select %p542, %s31, 1
        %s544 = scalar_lea.vmem %s11, %s543
        %p545 = pneg %p345
        %p546 = pneg %p342
        %p547 = pneg %p371
        %p548 = pneg %p368
        %s549 = sand.u32 %s358, 1
        %s550 = scalar_lea.sflag [#allocation3], %s549
        %s551 = sand.u32 %s358, 1
        %s552 = smul.addr %s551, 8
        %s553 = scalar_lea.vmem [#allocation2], %s552
        %p554 = scmp.lt.s32.totalorder %s30, 1
        %s555 = scalar_select %p554, %s30, 1
        %s556 = smul.addr %s555, 8
        %s557 = scalar_lea.vmem %s0, %s556
        %p558 = scmp.lt.s32.totalorder %s31, 1
        %s559 = scalar_select %p558, %s31, 1
        %s560 = scalar_lea.vmem %s1, %s559
        %p561 = scmp.lt.s32.totalorder %s31, 1
        %s562 = scalar_select %p561, %s31, 1
        %s563 = scalar_lea.vmem %s2, %s562
        %p564 = scmp.lt.s32.totalorder %s31, 1
        %s565 = scalar_select %p564, %s31, 1
        %s566 = smul.addr %s565, 4
        %s567 = smul.addr %s566, 4
        %s568 = scalar_lea.vmem %s3, %s567
        %p569 = scmp.lt.s32.totalorder %s31, 1
        %s570 = scalar_select %p569, %s31, 1
        %s571 = smul.addr %s570, 4
        %s572 = smul.addr %s571, 4
        %s573 = scalar_lea.vmem %s4, %s572
        %p574 = scmp.lt.s32.totalorder %s31, 1
        %s575 = scalar_select %p574, %s31, 1
        %s576 = scalar_lea.vmem %s5, %s575
        %p577 = scmp.lt.s32.totalorder %s31, 1
        %s578 = scalar_select %p577, %s31, 1
        %s579 = scalar_lea.vmem %s6, %s578
        %p580 = scmp.lt.s32.totalorder %s31, 1
        %s581 = scalar_select %p580, %s31, 1
        %s582 = scalar_lea.vmem %s7, %s581
        %p583 = scmp.lt.s32.totalorder %s31, 1
        %s584 = scalar_select %p583, %s31, 1
        %s585 = smul.addr %s584, 4
        %s586 = smul.addr %s585, 4
        %s587 = scalar_lea.vmem %s8, %s586
        %p588 = scmp.lt.s32.totalorder %s31, 1
        %s589 = scalar_select %p588, %s31, 1
        %s590 = scalar_lea.vmem %s9, %s589
        %p591 = scmp.lt.s32.totalorder %s31, 1
        %s592 = scalar_select %p591, %s31, 1
        %s593 = smul.addr %s592, 16
        %s594 = smul.addr %s593, 4
        %s595 = scalar_lea.vmem %s10, %s594
        %p596 = scmp.lt.s32.totalorder %s31, 1
        %s597 = scalar_select %p596, %s31, 1
        %s598 = scalar_lea.vmem %s11, %s597
        %p600 = scmp.eq.s32.totalorder %s31, 0
        // Predicated region
        $region69: #{tpu_custom_call.1} parent=67 // pred_check
          %p601 = pneg %p600
        $region70: #{tpu_custom_call.1} parent=67 // pred_check_branch
          %603 = sbr.rel (%p601) target = $region72
        $region71: #{tpu_custom_call.1} parent=67 // pred_region
          %v604 = vld [vmem:[%s557] sm:$0xff]
          %vm605 = vcmask 261120
          %606 = vst.msk [vmem:[%s553] sm:$0xff] %vm605, %v604
        $region72: #{tpu_custom_call.1} parent=67 // pred_fallthru
          _
        %v607 = vld [vmem:[%s553] sm:$0xff]
        %v608 = vld [vmem:[%s560] sm:$0x1]
        %v609 = vld [vmem:[%s563] sm:$0x1]
        %vm610 = vcmask 261120
        %v611 = vsel %vm610, %v607, 0.0
        %612 = vadd.xlane.f32.xlu0 %v611
        %v613 = vpop.xlane.xlu0 %612
        %v614 = vrcp.pop 32.0
        %v615 = vmul.f32 32.0, %v614
        %v616 = vsub.f32 1.0, %v615
        %v617 = vmul.f32 %v614, %v616
        %v618 = vadd.f32 %v614, %v617
        %vm619 = vweird.f32 %v614
        %v620 = vsel %vm619, %v614, %v618
        %v621 = vmul.f32 %v613, %v620
        %v622 = vsub.f32 %v607, %v621
        %v623 = vmul.f32 %v622, %v622
        %v624 = vsel %vm610, %v623, 0.0
        %625 = vadd.xlane.f32.xlu0 %v624
        %v626 = vpop.xlane.xlu0 %625
        %v627 = vmul.f32 %v626, %v620
        %v628 = vadd.f32 %v627, 1e-05
        %v629 = vrsqrt.pop %v628
        %v630 = vmul.f32 %v629, %v628
        %v631 = vmul.f32 %v630, %v629
        %v632 = vmul.f32 0.5, %v631
        %v633 = vsub.f32 1.5, %v632
        %v634 = vmul.f32 %v629, %v633
        %vm635 = vweird.f32 %v628
        %vm636 = vweird.f32 %v629
        %vm637 = vmor %vm635, %vm636
        %v638 = vsel %vm637, %v629, %v634
        %v639 = vmul.f32 %v622, %v638
        %v641 = vperm.slane %v608, 0
        %v643 = vmul.f32 %v639, %v641
        %v645 = vperm.slane %v609, 0
        %v647 = vadd.f32 %v643, %v645
        %v648 = vpack.c.bf16 %v647, %v647
        %v649 = vld [vmem:[%s568] sm:$0xf]
        %v650 = vld [vmem:[%s568 + $0x4] sm:$0xf]
        %v651 = vld [vmem:[%s568 + $0x8] sm:$0xf]
        %v652 = vld [vmem:[%s568 + $0xc] sm:$0xf]
        %v657 = vunpack.c.l.b16 %v649
        %v658 = vunpack.c.l.b16 %v650
        %v659 = vunpack.c.l.b16 %v651
        %v660 = vunpack.c.l.b16 %v652
        %v661 = vpack.c.b16 %v658, %v657
        %v662 = vpack.c.b16 %v660, %v659
        %v666 = vsel %vm610, %v648, 0
        %668 = vmatpush.bf16.msra.mxu0 0
        %669 = vmatpush.bf16.msra.mxu0 0
        %670 = vmatpush.bf16.msra.mxu0 0
        %671 = vmatpush.bf16.msra.mxu0 0
        %672 = vmatpush.bf16.msra.mxu0 0
        %673 = vmatpush.bf16.msra.mxu0 0
        %674 = vmatpush.bf16.msra.mxu0 %v662
        %675 = vmatpush.bf16.msra.mxu0 %v661
        %676 = vmatmul.bf16.gmra.mxu0 %v666
        %v677 = vpop.f32.mrf.mxu0
        %v678 = vadd.f32 0.0, %v677
        %v679 = vpop.f32.mrf.mxu0
        %680 = vdwg.mxu0
        %682 = vrot.lane.b32.xlu0 %v678, 120
        %v683 = vpop.permute.xlu0 %682
        %685 = vrot.lane.b32.xlu0 %v678, 112
        %v686 = vpop.permute.xlu0 %685
        %688 = vrot.lane.b32.xlu0 %v678, 104
        %v689 = vpop.permute.xlu0 %688
        %v691 = vrot.slane %v686, 4
        %vm692 = vcmask 1047556
        %v693 = vsel %vm692, %v691, %v678
        %v694 = vrot.slane %v678, 4
        %v695 = vsel %vm692, %v686, %v694
        %v697 = vunpack.c.l.s4 1983009808
        %v698 = vunpack.c.0.s8 %v697
        %v699 = vperm.slane %v693, %v698
        %v701 = vunpack.c.l.s4 1983009808
        %v702 = vunpack.c.0.s8 %v701
        %v703 = vperm.slane %v695, %v702
        %v704 = vrot.slane %v689, 4
        %v705 = vsel %vm692, %v704, %v683
        %v706 = vrot.slane %v683, 4
        %v707 = vsel %vm692, %v689, %v706
        %v709 = vunpack.c.l.s4 1983009808
        %v710 = vunpack.c.0.s8 %v709
        %v711 = vperm.slane %v705, %v710
        %v713 = vunpack.c.l.s4 1983009808
        %v714 = vunpack.c.0.s8 %v713
        %v715 = vperm.slane %v707, %v714
        %v716 = vrot.slane %v711, 4
        %v717 = vsel %vm692, %v716, %v699
        %v718 = vrot.slane %v699, 4
        %v719 = vsel %vm692, %v711, %v718
        %v721 = vunpack.c.l.s4 1934713408
        %v722 = vunpack.c.0.s8 %v721
        %v723 = vperm.slane %v717, %v722
        %v725 = vunpack.c.l.s4 1934713408
        %v726 = vunpack.c.0.s8 %v725
        %v727 = vperm.slane %v719, %v726
        %v728 = vrot.slane %v715, 4
        %v729 = vsel %vm692, %v728, %v703
        %v730 = vrot.slane %v703, 4
        %v731 = vsel %vm692, %v715, %v730
        %v733 = vunpack.c.l.s4 1934713408
        %v734 = vunpack.c.0.s8 %v733
        %v735 = vperm.slane %v729, %v734
        %v737 = vunpack.c.l.s4 1934713408
        %v738 = vunpack.c.0.s8 %v737
        %v739 = vperm.slane %v731, %v738
        %v740 = vrot.slane %v723, 4
        %v741 = vsel %vm692, 0.0, %v740
        %v742 = vrot.slane %v727, 4
        %v743 = vsel %vm692, 0.0, %v742
        %v744 = vrot.slane %v735, 4
        %v745 = vsel %vm692, 0.0, %v744
        %v746 = vrot.slane %v739, 4
        %v747 = vsel %vm692, 0.0, %v746
        %v748 = vsel %vm692, %v742, %v723
        %v750 = vunpack.c.l.s4 1983009808
        %v751 = vunpack.c.0.s8 %v750
        %v752 = vperm.slane %v748, %v751
        %v753 = vrot.slane %v743, 4
        %v754 = vsel %vm692, %v753, %v741
        %v756 = vunpack.c.l.s4 1983009808
        %v757 = vunpack.c.0.s8 %v756
        %v758 = vperm.slane %v754, %v757
        %v759 = vsel %vm692, %v746, %v735
        %v761 = vunpack.c.l.s4 1983009808
        %v762 = vunpack.c.0.s8 %v761
        %v763 = vperm.slane %v759, %v762
        %v764 = vrot.slane %v747, 4
        %v765 = vsel %vm692, %v764, %v745
        %v767 = vunpack.c.l.s4 1983009808
        %v768 = vunpack.c.0.s8 %v767
        %v769 = vperm.slane %v765, %v768
        %v770 = vrot.slane %v758, 4
        %v771 = vsel %vm692, %v770, %v752
        %v772 = vrot.slane %v752, 4
        %v773 = vsel %vm692, %v758, %v772
        %v775 = vunpack.c.l.s4 1934713408
        %v776 = vunpack.c.0.s8 %v775
        %v777 = vperm.slane %v771, %v776
        %v779 = vunpack.c.l.s4 1934713408
        %v780 = vunpack.c.0.s8 %v779
        %v781 = vperm.slane %v773, %v780
        %v782 = vrot.slane %v769, 4
        %v783 = vsel %vm692, %v782, %v763
        %v784 = vrot.slane %v763, 4
        %v785 = vsel %vm692, %v769, %v784
        %v787 = vunpack.c.l.s4 1934713408
        %v788 = vunpack.c.0.s8 %v787
        %v789 = vperm.slane %v783, %v788
        %v791 = vunpack.c.l.s4 1934713408
        %v792 = vunpack.c.0.s8 %v791
        %v793 = vperm.slane %v785, %v792
        %v794 = vrot.slane %v789, 4
        %v795 = vsel %vm692, %v794, %v777
        %v796 = vrot.slane %v777, 4
        %v797 = vsel %vm692, %v789, %v796
        %v798 = vrot.slane %v793, 4
        %v799 = vsel %vm692, %v798, %v781
        %v800 = vrot.slane %v781, 4
        %v801 = vsel %vm692, %v793, %v800
        %802 = vrot.lane.b32.xlu0 %v678, 96
        %v803 = vpop.permute.xlu0 %802
        %804 = vrot.lane.b32.xlu0 %v683, 96
        %v805 = vpop.permute.xlu0 %804
        %806 = vrot.lane.b32.xlu0 %v686, 96
        %v807 = vpop.permute.xlu0 %806
        %808 = vrot.lane.b32.xlu0 %v689, 96
        %v809 = vpop.permute.xlu0 %808
        %v814 = vrot.slane %v807, 4
        %v815 = vsel %vm692, %v814, %v803
        %v816 = vrot.slane %v803, 4
        %v817 = vsel %vm692, %v807, %v816
        %v819 = vunpack.c.l.s4 1983009808
        %v820 = vunpack.c.0.s8 %v819
        %v821 = vperm.slane %v815, %v820
        %v823 = vunpack.c.l.s4 1983009808
        %v824 = vunpack.c.0.s8 %v823
        %v825 = vperm.slane %v817, %v824
        %v826 = vrot.slane %v809, 4
        %v827 = vsel %vm692, %v826, %v805
        %v828 = vrot.slane %v805, 4
        %v829 = vsel %vm692, %v809, %v828
        %v831 = vunpack.c.l.s4 1983009808
        %v832 = vunpack.c.0.s8 %v831
        %v833 = vperm.slane %v827, %v832
        %v835 = vunpack.c.l.s4 1983009808
        %v836 = vunpack.c.0.s8 %v835
        %v837 = vperm.slane %v829, %v836
        %v838 = vrot.slane %v833, 4
        %v839 = vsel %vm692, %v838, %v821
        %v840 = vrot.slane %v821, 4
        %v841 = vsel %vm692, %v833, %v840
        %v843 = vunpack.c.l.s4 1934713408
        %v844 = vunpack.c.0.s8 %v843
        %v845 = vperm.slane %v839, %v844
        %v847 = vunpack.c.l.s4 1934713408
        %v848 = vunpack.c.0.s8 %v847
        %v849 = vperm.slane %v841, %v848
        %v850 = vrot.slane %v837, 4
        %v851 = vsel %vm692, %v850, %v825
        %v852 = vrot.slane %v825, 4
        %v853 = vsel %vm692, %v837, %v852
        %v855 = vunpack.c.l.s4 1934713408
        %v856 = vunpack.c.0.s8 %v855
        %v857 = vperm.slane %v851, %v856
        %v859 = vunpack.c.l.s4 1934713408
        %v860 = vunpack.c.0.s8 %v859
        %v861 = vperm.slane %v853, %v860
        %v862 = vrot.slane %v845, 4
        %v863 = vsel %vm692, 0.0, %v862
        %v864 = vrot.slane %v849, 4
        %v865 = vsel %vm692, 0.0, %v864
        %v866 = vrot.slane %v857, 4
        %v867 = vsel %vm692, 0.0, %v866
        %v868 = vrot.slane %v861, 4
        %v869 = vsel %vm692, 0.0, %v868
        %v870 = vsel %vm692, %v864, %v845
        %v872 = vunpack.c.l.s4 1983009808
        %v873 = vunpack.c.0.s8 %v872
        %v874 = vperm.slane %v870, %v873
        %v875 = vrot.slane %v865, 4
        %v876 = vsel %vm692, %v875, %v863
        %v878 = vunpack.c.l.s4 1983009808
        %v879 = vunpack.c.0.s8 %v878
        %v880 = vperm.slane %v876, %v879
        %v881 = vsel %vm692, %v868, %v857
        %v883 = vunpack.c.l.s4 1983009808
        %v884 = vunpack.c.0.s8 %v883
        %v885 = vperm.slane %v881, %v884
        %v886 = vrot.slane %v869, 4
        %v887 = vsel %vm692, %v886, %v867
        %v889 = vunpack.c.l.s4 1983009808
        %v890 = vunpack.c.0.s8 %v889
        %v891 = vperm.slane %v887, %v890
        %v892 = vrot.slane %v880, 4
        %v893 = vsel %vm692, %v892, %v874
        %v894 = vrot.slane %v874, 4
        %v895 = vsel %vm692, %v880, %v894
        %v897 = vunpack.c.l.s4 1934713408
        %v898 = vunpack.c.0.s8 %v897
        %v899 = vperm.slane %v893, %v898
        %v901 = vunpack.c.l.s4 1934713408
        %v902 = vunpack.c.0.s8 %v901
        %v903 = vperm.slane %v895, %v902
        %v904 = vrot.slane %v891, 4
        %v905 = vsel %vm692, %v904, %v885
        %v906 = vrot.slane %v885, 4
        %v907 = vsel %vm692, %v891, %v906
        %v909 = vunpack.c.l.s4 1934713408
        %v910 = vunpack.c.0.s8 %v909
        %v911 = vperm.slane %v905, %v910
        %v913 = vunpack.c.l.s4 1934713408
        %v914 = vunpack.c.0.s8 %v913
        %v915 = vperm.slane %v907, %v914
        %v916 = vrot.slane %v911, 4
        %v917 = vsel %vm692, %v916, %v899
        %v918 = vrot.slane %v899, 4
        %v919 = vsel %vm692, %v911, %v918
        %v920 = vrot.slane %v915, 4
        %v921 = vsel %vm692, %v920, %v903
        %v922 = vrot.slane %v903, 4
        %v923 = vsel %vm692, %v915, %v922
        %924 = vrot.lane.b32.xlu0 %v678, 64
        %v925 = vpop.permute.xlu0 %924
        %926 = vrot.lane.b32.xlu0 %v683, 64
        %v927 = vpop.permute.xlu0 %926
        %928 = vrot.lane.b32.xlu0 %v686, 64
        %v929 = vpop.permute.xlu0 %928
        %930 = vrot.lane.b32.xlu0 %v689, 64
        %v931 = vpop.permute.xlu0 %930
        %v936 = vrot.slane %v929, 4
        %v937 = vsel %vm692, %v936, %v925
        %v938 = vrot.slane %v925, 4
        %v939 = vsel %vm692, %v929, %v938
        %v941 = vunpack.c.l.s4 1983009808
        %v942 = vunpack.c.0.s8 %v941
        %v943 = vperm.slane %v937, %v942
        %v945 = vunpack.c.l.s4 1983009808
        %v946 = vunpack.c.0.s8 %v945
        %v947 = vperm.slane %v939, %v946
        %v948 = vrot.slane %v931, 4
        %v949 = vsel %vm692, %v948, %v927
        %v950 = vrot.slane %v927, 4
        %v951 = vsel %vm692, %v931, %v950
        %v953 = vunpack.c.l.s4 1983009808
        %v954 = vunpack.c.0.s8 %v953
        %v955 = vperm.slane %v949, %v954
        %v957 = vunpack.c.l.s4 1983009808
        %v958 = vunpack.c.0.s8 %v957
        %v959 = vperm.slane %v951, %v958
        %v960 = vrot.slane %v955, 4
        %v961 = vsel %vm692, %v960, %v943
        %v962 = vrot.slane %v943, 4
        %v963 = vsel %vm692, %v955, %v962
        %v965 = vunpack.c.l.s4 1934713408
        %v966 = vunpack.c.0.s8 %v965
        %v967 = vperm.slane %v961, %v966
        %v969 = vunpack.c.l.s4 1934713408
        %v970 = vunpack.c.0.s8 %v969
        %v971 = vperm.slane %v963, %v970
        %v972 = vrot.slane %v959, 4
        %v973 = vsel %vm692, %v972, %v947
        %v974 = vrot.slane %v947, 4
        %v975 = vsel %vm692, %v959, %v974
        %v977 = vunpack.c.l.s4 1934713408
        %v978 = vunpack.c.0.s8 %v977
        %v979 = vperm.slane %v973, %v978
        %v981 = vunpack.c.l.s4 1934713408
        %v982 = vunpack.c.0.s8 %v981
        %v983 = vperm.slane %v975, %v982
        %v984 = vrot.slane %v967, 4
        %v985 = vsel %vm692, 0.0, %v984
        %v986 = vrot.slane %v971, 4
        %v987 = vsel %vm692, 0.0, %v986
        %v988 = vrot.slane %v979, 4
        %v989 = vsel %vm692, 0.0, %v988
        %v990 = vrot.slane %v983, 4
        %v991 = vsel %vm692, 0.0, %v990
        %v992 = vsel %vm692, %v986, %v967
        %v994 = vunpack.c.l.s4 1983009808
        %v995 = vunpack.c.0.s8 %v994
        %v996 = vperm.slane %v992, %v995
        %v997 = vrot.slane %v987, 4
        %v998 = vsel %vm692, %v997, %v985
        %v1000 = vunpack.c.l.s4 1983009808
        %v1001 = vunpack.c.0.s8 %v1000
        %v1002 = vperm.slane %v998, %v1001
        %v1003 = vsel %vm692, %v990, %v979
        %v1005 = vunpack.c.l.s4 1983009808
        %v1006 = vunpack.c.0.s8 %v1005
        %v1007 = vperm.slane %v1003, %v1006
        %v1008 = vrot.slane %v991, 4
        %v1009 = vsel %vm692, %v1008, %v989
        %v1011 = vunpack.c.l.s4 1983009808
        %v1012 = vunpack.c.0.s8 %v1011
        %v1013 = vperm.slane %v1009, %v1012
        %v1014 = vrot.slane %v1002, 4
        %v1015 = vsel %vm692, %v1014, %v996
        %v1016 = vrot.slane %v996, 4
        %v1017 = vsel %vm692, %v1002, %v1016
        %v1019 = vunpack.c.l.s4 1934713408
        %v1020 = vunpack.c.0.s8 %v1019
        %v1021 = vperm.slane %v1015, %v1020
        %v1023 = vunpack.c.l.s4 1934713408
        %v1024 = vunpack.c.0.s8 %v1023
        %v1025 = vperm.slane %v1017, %v1024
        %v1026 = vrot.slane %v1013, 4
        %v1027 = vsel %vm692, %v1026, %v1007
        %v1028 = vrot.slane %v1007, 4
        %v1029 = vsel %vm692, %v1013, %v1028
        %v1031 = vunpack.c.l.s4 1934713408
        %v1032 = vunpack.c.0.s8 %v1031
        %v1033 = vperm.slane %v1027, %v1032
        %v1035 = vunpack.c.l.s4 1934713408
        %v1036 = vunpack.c.0.s8 %v1035
        %v1037 = vperm.slane %v1029, %v1036
        %v1038 = vrot.slane %v1033, 4
        %v1039 = vsel %vm692, %v1038, %v1021
        %v1040 = vrot.slane %v1021, 4
        %v1041 = vsel %vm692, %v1033, %v1040
        %v1042 = vrot.slane %v1037, 4
        %v1043 = vsel %vm692, %v1042, %v1025
        %v1044 = vrot.slane %v1025, 4
        %v1045 = vsel %vm692, %v1037, %v1044
        %v1046 = vpack.c.bf16 %v795, %v795
        %v1047 = vpack.c.bf16 %v797, %v797
        %v1048 = vpack.c.bf16 %v799, %v799
        %v1049 = vpack.c.bf16 %v801, %v801
        %v1050 = vpack.c.bf16 %v917, %v917
        %v1051 = vpack.c.bf16 %v919, %v919
        %v1052 = vpack.c.bf16 %v921, %v921
        %v1053 = vpack.c.bf16 %v923, %v923
        %vm1054 = vcmask 64512
        %v1056 = vsel %vm1054, %v1046, 0
        %v1059 = vsel %vm1054, %v1050, 0
        %1061 = vmatpush.bf16.xpose.msra.mxu0 0
        %1062 = vmatpush.bf16.xpose.msra.mxu0 0
        %1063 = vmatpush.bf16.xpose.msra.mxu0 0
        %1064 = vmatpush.bf16.xpose.msra.mxu0 0
        %1065 = vmatpush.bf16.xpose.msra.mxu0 0
        %1066 = vmatpush.bf16.xpose.msra.mxu0 0
        %1067 = vmatpush.bf16.xpose.msra.mxu0 0
        %1068 = vmatpush.bf16.xpose.msra.mxu0 %v1059
        %1069 = vmatmul.bf16.gmra.mxu0 %v1056
        %v1070 = vpop.f32.mrf.mxu0
        %v1071 = vadd.f32 0.0, %v1070
        %v1072 = vpop.f32.mrf.mxu0
        %1073 = vdwg.mxu0
        %v1075 = vsel %vm1054, %v1047, 0
        %v1078 = vsel %vm1054, %v1051, 0
        %1080 = vmatpush.bf16.xpose.msra.mxu0 0
        %1081 = vmatpush.bf16.xpose.msra.mxu0 0
        %1082 = vmatpush.bf16.xpose.msra.mxu0 0
        %1083 = vmatpush.bf16.xpose.msra.mxu0 0
        %1084 = vmatpush.bf16.xpose.msra.mxu0 0
        %1085 = vmatpush.bf16.xpose.msra.mxu0 0
        %1086 = vmatpush.bf16.xpose.msra.mxu0 0
        %1087 = vmatpush.bf16.xpose.msra.mxu0 %v1078
        %1088 = vmatmul.bf16.gmra.mxu0 %v1075
        %v1089 = vpop.f32.mrf.mxu0
        %v1090 = vadd.f32 0.0, %v1089
        %v1091 = vpop.f32.mrf.mxu0
        %1092 = vdwg.mxu0
        %v1094 = vsel %vm1054, %v1048, 0
        %v1097 = vsel %vm1054, %v1052, 0
        %1099 = vmatpush.bf16.xpose.msra.mxu0 0
        %1100 = vmatpush.bf16.xpose.msra.mxu0 0
        %1101 = vmatpush.bf16.xpose.msra.mxu0 0
        %1102 = vmatpush.bf16.xpose.msra.mxu0 0
        %1103 = vmatpush.bf16.xpose.msra.mxu0 0
        %1104 = vmatpush.bf16.xpose.msra.mxu0 0
        %1105 = vmatpush.bf16.xpose.msra.mxu0 0
        %1106 = vmatpush.bf16.xpose.msra.mxu0 %v1097
        %1107 = vmatmul.bf16.gmra.mxu0 %v1094
        %v1108 = vpop.f32.mrf.mxu0
        %v1109 = vadd.f32 0.0, %v1108
        %v1110 = vpop.f32.mrf.mxu0
        %1111 = vdwg.mxu0
        %v1113 = vsel %vm1054, %v1049, 0
        %v1116 = vsel %vm1054, %v1053, 0
        %1118 = vmatpush.bf16.xpose.msra.mxu0 0
        %1119 = vmatpush.bf16.xpose.msra.mxu0 0
        %1120 = vmatpush.bf16.xpose.msra.mxu0 0
        %1121 = vmatpush.bf16.xpose.msra.mxu0 0
        %1122 = vmatpush.bf16.xpose.msra.mxu0 0
        %1123 = vmatpush.bf16.xpose.msra.mxu0 0
        %1124 = vmatpush.bf16.xpose.msra.mxu0 0
        %1125 = vmatpush.bf16.xpose.msra.mxu0 %v1116
        %1126 = vmatmul.bf16.gmra.mxu0 %v1113
        %v1127 = vpop.f32.mrf.mxu0
        %v1128 = vadd.f32 0.0, %v1127
        %v1129 = vpop.f32.mrf.mxu0
        %1130 = vdwg.mxu0
        %v1131 = vmul.f32 %v1071, 0.35355338
        %v1132 = vmul.f32 %v1090, 0.35355338
        %v1133 = vmul.f32 %v1109, 0.35355338
        %v1134 = vmul.f32 %v1128, 0.35355338
        %v1135 = vlaneseq
        %v1136 = vshrl.u32 %v1135, 7
        %v1137 = vlaneseq
        %v1138 = vand.u32 %v1137, 127
        %vm1139 = vcmp.ge.s32.totalorder %v1136, %v1138
        %v1140 = vsel %vm1139, 1, 0
        %vm1141 = vcmp.eq.s32.totalorder %v1140, 1
        %v1142 = vsel %vm1141, %v1131, -1e+30
        %v1143 = vsel %vm1141, %v1132, -1e+30
        %v1144 = vsel %vm1141, %v1133, -1e+30
        %v1145 = vsel %vm1141, %v1134, -1e+30
        %v1146 = vsel %vm1054, %v1142, -inf
        %1147 = vmax.xlane.f32.xlu0 %v1146
        %v1148 = vpop.xlane.xlu0 %1147
        %v1149 = vsel %vm1054, %v1143, -inf
        %1150 = vmax.xlane.f32.xlu0 %v1149
        %v1151 = vpop.xlane.xlu0 %1150
        %v1152 = vsel %vm1054, %v1144, -inf
        %1153 = vmax.xlane.f32.xlu0 %v1152
        %v1154 = vpop.xlane.xlu0 %1153
        %v1155 = vsel %vm1054, %v1145, -inf
        %1156 = vmax.xlane.f32.xlu0 %v1155
        %v1157 = vpop.xlane.xlu0 %1156
        %v1158 = vsub.f32 %v1142, %v1148
        %v1159 = vsub.f32 %v1143, %v1151
        %v1160 = vsub.f32 %v1144, %v1154
        %v1161 = vsub.f32 %v1145, %v1157
        %v1162 = vmul.f32 %v1158, 1.442695
        %v1163 = vpow.pop %v1162
        %v1164 = vmul.f32 %v1159, 1.442695
        %v1165 = vpow.pop %v1164
        %v1166 = vmul.f32 %v1160, 1.442695
        %v1167 = vpow.pop %v1166
        %v1168 = vmul.f32 %v1161, 1.442695
        %v1169 = vpow.pop %v1168
        %v1170 = vsel %vm1054, %v1163, 0.0
        %1171 = vadd.xlane.f32.xlu0 %v1170
        %v1172 = vpop.xlane.xlu0 %1171
        %v1173 = vsel %vm1054, %v1165, 0.0
        %1174 = vadd.xlane.f32.xlu0 %v1173
        %v1175 = vpop.xlane.xlu0 %1174
        %v1176 = vsel %vm1054, %v1167, 0.0
        %1177 = vadd.xlane.f32.xlu0 %v1176
        %v1178 = vpop.xlane.xlu0 %1177
        %v1179 = vsel %vm1054, %v1169, 0.0
        %1180 = vadd.xlane.f32.xlu0 %v1179
        %v1181 = vpop.xlane.xlu0 %1180
        %v1182 = vrcp.pop %v1172
        %v1183 = vrcp.pop %v1175
        %v1184 = vrcp.pop %v1178
        %v1185 = vrcp.pop %v1181
        %v1186 = vmul.f32 %v1163, %v1182
        %v1187 = vmul.f32 %v1165, %v1183
        %v1188 = vmul.f32 %v1167, %v1184
        %v1189 = vmul.f32 %v1169, %v1185
        %v1190 = vpack.c.bf16 %v1186, %v1186
        %v1191 = vpack.c.bf16 %v1187, %v1187
        %v1192 = vpack.c.bf16 %v1188, %v1188
        %v1193 = vpack.c.bf16 %v1189, %v1189
        %v1194 = vpack.c.bf16 %v1039, %v1039
        %v1195 = vpack.c.bf16 %v1041, %v1041
        %v1196 = vpack.c.bf16 %v1043, %v1043
        %v1197 = vpack.c.bf16 %v1045, %v1045
        %v1199 = vsel %vm1054, %v1190, 0
        %vm1201 = vcmask 1043456
        %v1203 = vsel %vm1201, %v1194, 0
        %1205 = vmatpush.bf16.msra.mxu0 0
        %1206 = vmatpush.bf16.msra.mxu0 0
        %1207 = vmatpush.bf16.msra.mxu0 0
        %1208 = vmatpush.bf16.msra.mxu0 0
        %1209 = vmatpush.bf16.msra.mxu0 0
        %1210 = vmatpush.bf16.msra.mxu0 0
        %1211 = vmatpush.bf16.msra.mxu0 0
        %1212 = vmatpush.bf16.msra.mxu0 %v1203
        %1213 = vmatmul.bf16.gmra.mxu0 %v1199
        %v1214 = vpop.f32.mrf.mxu0
        %v1215 = vadd.f32 0.0, %v1214
        %v1216 = vpop.f32.mrf.mxu0
        %1217 = vdwg.mxu0
        %v1219 = vsel %vm1054, %v1191, 0
        %v1222 = vsel %vm1201, %v1195, 0
        %1224 = vmatpush.bf16.msra.mxu0 0
        %1225 = vmatpush.bf16.msra.mxu0 0
        %1226 = vmatpush.bf16.msra.mxu0 0
        %1227 = vmatpush.bf16.msra.mxu0 0
        %1228 = vmatpush.bf16.msra.mxu0 0
        %1229 = vmatpush.bf16.msra.mxu0 0
        %1230 = vmatpush.bf16.msra.mxu0 0
        %1231 = vmatpush.bf16.msra.mxu0 %v1222
        %1232 = vmatmul.bf16.gmra.mxu0 %v1219
        %v1233 = vpop.f32.mrf.mxu0
        %v1234 = vadd.f32 0.0, %v1233
        %v1235 = vpop.f32.mrf.mxu0
        %1236 = vdwg.mxu0
        %v1238 = vsel %vm1054, %v1192, 0
        %v1241 = vsel %vm1201, %v1196, 0
        %1243 = vmatpush.bf16.msra.mxu0 0
        %1244 = vmatpush.bf16.msra.mxu0 0
        %1245 = vmatpush.bf16.msra.mxu0 0
        %1246 = vmatpush.bf16.msra.mxu0 0
        %1247 = vmatpush.bf16.msra.mxu0 0
        %1248 = vmatpush.bf16.msra.mxu0 0
        %1249 = vmatpush.bf16.msra.mxu0 0
        %1250 = vmatpush.bf16.msra.mxu0 %v1241
        %1251 = vmatmul.bf16.gmra.mxu0 %v1238
        %v1252 = vpop.f32.mrf.mxu0
        %v1253 = vadd.f32 0.0, %v1252
        %v1254 = vpop.f32.mrf.mxu0
        %1255 = vdwg.mxu0
        %v1257 = vsel %vm1054, %v1193, 0
        %v1260 = vsel %vm1201, %v1197, 0
        %1262 = vmatpush.bf16.msra.mxu0 0
        %1263 = vmatpush.bf16.msra.mxu0 0
        %1264 = vmatpush.bf16.msra.mxu0 0
        %1265 = vmatpush.bf16.msra.mxu0 0
        %1266 = vmatpush.bf16.msra.mxu0 0
        %1267 = vmatpush.bf16.msra.mxu0 0
        %1268 = vmatpush.bf16.msra.mxu0 0
        %1269 = vmatpush.bf16.msra.mxu0 %v1260
        %1270 = vmatmul.bf16.gmra.mxu0 %v1257
        %v1271 = vpop.f32.mrf.mxu0
        %v1272 = vadd.f32 0.0, %v1271
        %v1273 = vpop.f32.mrf.mxu0
        %1274 = vdwg.mxu0
        %v1275 = vrot.slane %v1253, 4
        %v1276 = vsel %vm692, %v1275, %v1215
        %v1277 = vrot.slane %v1215, 4
        %v1278 = vsel %vm692, %v1253, %v1277
        %v1280 = vunpack.c.l.s4 1983009808
        %v1281 = vunpack.c.0.s8 %v1280
        %v1282 = vperm.slane %v1276, %v1281
        %v1284 = vunpack.c.l.s4 1983009808
        %v1285 = vunpack.c.0.s8 %v1284
        %v1286 = vperm.slane %v1278, %v1285
        %v1287 = vrot.slane %v1272, 4
        %v1288 = vsel %vm692, %v1287, %v1234
        %v1289 = vrot.slane %v1234, 4
        %v1290 = vsel %vm692, %v1272, %v1289
        %v1292 = vunpack.c.l.s4 1983009808
        %v1293 = vunpack.c.0.s8 %v1292
        %v1294 = vperm.slane %v1288, %v1293
        %v1296 = vunpack.c.l.s4 1983009808
        %v1297 = vunpack.c.0.s8 %v1296
        %v1298 = vperm.slane %v1290, %v1297
        %v1299 = vrot.slane %v1294, 4
        %v1300 = vsel %vm692, %v1299, %v1282
        %v1301 = vrot.slane %v1282, 4
        %v1302 = vsel %vm692, %v1294, %v1301
        %v1304 = vunpack.c.l.s4 1934713408
        %v1305 = vunpack.c.0.s8 %v1304
        %v1306 = vperm.slane %v1300, %v1305
        %v1308 = vunpack.c.l.s4 1934713408
        %v1309 = vunpack.c.0.s8 %v1308
        %v1310 = vperm.slane %v1302, %v1309
        %v1311 = vrot.slane %v1298, 4
        %v1312 = vsel %vm692, %v1311, %v1286
        %v1313 = vrot.slane %v1286, 4
        %v1314 = vsel %vm692, %v1298, %v1313
        %v1316 = vunpack.c.l.s4 1934713408
        %v1317 = vunpack.c.0.s8 %v1316
        %v1318 = vperm.slane %v1312, %v1317
        %v1320 = vunpack.c.l.s4 1934713408
        %v1321 = vunpack.c.0.s8 %v1320
        %v1322 = vperm.slane %v1314, %v1321
        %v1323 = vrot.slane %v1306, 4
        %v1324 = vsel %vm692, 0.0, %v1323
        %v1325 = vrot.slane %v1310, 4
        %v1326 = vsel %vm692, 0.0, %v1325
        %v1327 = vrot.slane %v1318, 4
        %v1328 = vsel %vm692, 0.0, %v1327
        %v1329 = vrot.slane %v1322, 4
        %v1330 = vsel %vm692, 0.0, %v1329
        %v1331 = vsel %vm692, %v1325, %v1306
        %v1333 = vunpack.c.l.s4 1983009808
        %v1334 = vunpack.c.0.s8 %v1333
        %v1335 = vperm.slane %v1331, %v1334
        %v1336 = vrot.slane %v1326, 4
        %v1337 = vsel %vm692, %v1336, %v1324
        %v1339 = vunpack.c.l.s4 1983009808
        %v1340 = vunpack.c.0.s8 %v1339
        %v1341 = vperm.slane %v1337, %v1340
        %v1342 = vsel %vm692, %v1329, %v1318
        %v1344 = vunpack.c.l.s4 1983009808
        %v1345 = vunpack.c.0.s8 %v1344
        %v1346 = vperm.slane %v1342, %v1345
        %v1347 = vrot.slane %v1330, 4
        %v1348 = vsel %vm692, %v1347, %v1328
        %v1350 = vunpack.c.l.s4 1983009808
        %v1351 = vunpack.c.0.s8 %v1350
        %v1352 = vperm.slane %v1348, %v1351
        %v1353 = vrot.slane %v1341, 4
        %v1354 = vsel %vm692, %v1353, %v1335
        %v1355 = vrot.slane %v1335, 4
        %v1356 = vsel %vm692, %v1341, %v1355
        %v1358 = vunpack.c.l.s4 1934713408
        %v1359 = vunpack.c.0.s8 %v1358
        %v1360 = vperm.slane %v1354, %v1359
        %v1362 = vunpack.c.l.s4 1934713408
        %v1363 = vunpack.c.0.s8 %v1362
        %v1364 = vperm.slane %v1356, %v1363
        %v1365 = vrot.slane %v1352, 4
        %v1366 = vsel %vm692, %v1365, %v1346
        %v1367 = vrot.slane %v1346, 4
        %v1368 = vsel %vm692, %v1352, %v1367
        %v1370 = vunpack.c.l.s4 1934713408
        %v1371 = vunpack.c.0.s8 %v1370
        %v1372 = vperm.slane %v1366, %v1371
        %v1374 = vunpack.c.l.s4 1934713408
        %v1375 = vunpack.c.0.s8 %v1374
        %v1376 = vperm.slane %v1368, %v1375
        %v1377 = vrot.slane %v1372, 4
        %v1378 = vsel %vm692, %v1377, %v1360
        %v1379 = vrot.slane %v1360, 4
        %v1380 = vsel %vm692, %v1372, %v1379
        %v1381 = vrot.slane %v1376, 4
        %v1382 = vsel %vm692, %v1381, %v1364
        %v1383 = vrot.slane %v1364, 4
        %v1384 = vsel %vm692, %v1376, %v1383
        %1386 = vrot.lane.b32.xlu0 %v1380, 8
        %v1387 = vpop.permute.xlu0 %1386
        %1390 = vrot.lane.b32.xlu0 %v1382, 16
        %v1391 = vpop.permute.xlu0 %1390
        %1394 = vrot.lane.b32.xlu0 %v1384, 24
        %v1395 = vpop.permute.xlu0 %1394
        %v1397 = vsel %vm1054, %v1378, %v1387
        %vm1398 = vcmask 130048
        %v1399 = vsel %vm1398, %v1397, %v1391
        %vm1400 = vcmask 195584
        %v1401 = vsel %vm1400, %v1399, %v1395
        %v1402 = vpack.c.bf16 %v1401, %v1401
        %v1403 = vld [vmem:[%s573] sm:$0xf]
        %v1404 = vld [vmem:[%s573 + $0x4] sm:$0xf]
        %v1405 = vld [vmem:[%s573 + $0x8] sm:$0xf]
        %v1406 = vld [vmem:[%s573 + $0xc] sm:$0xf]
        %v1407 = vld [vmem:[%s576] sm:$0x1]
        %v1409 = vperm.slane %v1407, 0
        %v1415 = vunpack.c.l.b16 %v1403
        %v1416 = vunpack.c.l.b16 %v1404
        %v1417 = vunpack.c.l.b16 %v1405
        %v1418 = vunpack.c.l.b16 %v1406
        %v1419 = vpack.c.b16 %v1416, %v1415
        %v1420 = vpack.c.b16 %v1418, %v1417
        %v1424 = vsel %vm610, %v1402, 0
        %1426 = vmatpush.bf16.msra.mxu0 0
        %1427 = vmatpush.bf16.msra.mxu0 0
        %1428 = vmatpush.bf16.msra.mxu0 0
        %1429 = vmatpush.bf16.msra.mxu0 0
        %1430 = vmatpush.bf16.msra.mxu0 0
        %1431 = vmatpush.bf16.msra.mxu0 0
        %1432 = vmatpush.bf16.msra.mxu0 %v1420
        %1433 = vmatpush.bf16.msra.mxu0 %v1419
        %1434 = vmatmul.bf16.gmra.mxu0 %v1424
        %v1435 = vpop.f32.mrf.mxu0
        %v1436 = vadd.f32 %v1409, %v1435
        %v1437 = vpop.f32.mrf.mxu0
        %1438 = vdwg.mxu0
        %v1439 = vadd.f32 %v607, %v1436
        %v1440 = vld [vmem:[%s579] sm:$0x1]
        %v1441 = vld [vmem:[%s582] sm:$0x1]
        %v1442 = vsel %vm610, %v1439, 0.0
        %1443 = vadd.xlane.f32.xlu0 %v1442
        %v1444 = vpop.xlane.xlu0 %1443
        %v1445 = vmul.f32 %v1444, %v620
        %v1446 = vsub.f32 %v1439, %v1445
        %v1447 = vmul.f32 %v1446, %v1446
        %v1448 = vsel %vm610, %v1447, 0.0
        %1449 = vadd.xlane.f32.xlu0 %v1448
        %v1450 = vpop.xlane.xlu0 %1449
        %v1451 = vmul.f32 %v1450, %v620
        %v1452 = vadd.f32 %v1451, 1e-05
        %v1453 = vrsqrt.pop %v1452
        %v1454 = vmul.f32 %v1453, %v1452
        %v1455 = vmul.f32 %v1454, %v1453
        %v1456 = vmul.f32 0.5, %v1455
        %v1457 = vsub.f32 1.5, %v1456
        %v1458 = vmul.f32 %v1453, %v1457
        %vm1459 = vweird.f32 %v1452
        %vm1460 = vweird.f32 %v1453
        %vm1461 = vmor %vm1459, %vm1460
        %v1462 = vsel %vm1461, %v1453, %v1458
        %v1463 = vmul.f32 %v1446, %v1462
        %v1465 = vperm.slane %v1440, 0
        %v1467 = vmul.f32 %v1463, %v1465
        %v1469 = vperm.slane %v1441, 0
        %v1471 = vadd.f32 %v1467, %v1469
        %v1472 = vpack.c.bf16 %v1471, %v1471
        %v1473 = vld [vmem:[%s587] sm:$0xf]
        %v1474 = vld [vmem:[%s587 + $0x4] sm:$0xf]
        %v1475 = vld [vmem:[%s587 + $0x8] sm:$0xf]
        %v1476 = vld [vmem:[%s587 + $0xc] sm:$0xf]
        %v1477 = vld [vmem:[%s590] sm:$0x1]
        %v1479 = vperm.slane %v1477, 0
        %v1485 = vunpack.c.l.b16 %v1473
        %v1486 = vunpack.c.l.b16 %v1474
        %v1487 = vunpack.c.l.b16 %v1475
        %v1488 = vunpack.c.l.b16 %v1476
        %v1489 = vpack.c.b16 %v1486, %v1485
        %v1490 = vpack.c.b16 %v1488, %v1487
        %v1494 = vsel %vm610, %v1472, 0
        %1496 = vmatpush.bf16.msra.mxu0 0
        %1497 = vmatpush.bf16.msra.mxu0 0
        %1498 = vmatpush.bf16.msra.mxu0 0
        %1499 = vmatpush.bf16.msra.mxu0 0
        %1500 = vmatpush.bf16.msra.mxu0 0
        %1501 = vmatpush.bf16.msra.mxu0 0
        %1502 = vmatpush.bf16.msra.mxu0 %v1490
        %1503 = vmatpush.bf16.msra.mxu0 %v1489
        %1504 = vmatmul.bf16.gmra.mxu0 %v1494
        %v1505 = vpop.f32.mrf.mxu0
        %v1506 = vadd.f32 %v1479, %v1505
        %v1507 = vpop.f32.mrf.mxu0
        %1508 = vdwg.mxu0
        %v1509 = vmul.f32 %v1506, 0.5
        %v1510 = vmul.f32 %v1506, 0.044715
        %v1511 = vmul.f32 %v1510, %v1506
        %v1512 = vmul.f32 %v1511, %v1506
        %v1513 = vadd.f32 %v1506, %v1512
        %v1514 = vmul.f32 %v1513, 0.7978846
        %v1515 = vtanh.pop %v1514
        %v1516 = vadd.f32 %v1515, 1.0
        %v1517 = vmul.f32 %v1509, %v1516
        %v1518 = vpack.c.bf16 %v1517, %v1517
        %v1519 = vld [vmem:[%s595] sm:$0xf]
        %v1520 = vld [vmem:[%s595 + $0x4] sm:$0xf]
        %v1521 = vld [vmem:[%s595 + $0x8] sm:$0xf]
        %v1522 = vld [vmem:[%s595 + $0xc] sm:$0xf]
        %v1523 = vld [vmem:[%s595 + $0x10] sm:$0xf]
        %v1524 = vld [vmem:[%s595 + $0x14] sm:$0xf]
        %v1525 = vld [vmem:[%s595 + $0x18] sm:$0xf]
        %v1526 = vld [vmem:[%s595 + $0x1c] sm:$0xf]
        %v1527 = vld [vmem:[%s595 + $0x20] sm:$0xf]
        %v1528 = vld [vmem:[%s595 + $0x24] sm:$0xf]
        %v1529 = vld [vmem:[%s595 + $0x28] sm:$0xf]
        %v1530 = vld [vmem:[%s595 + $0x2c] sm:$0xf]
        %v1531 = vld [vmem:[%s595 + $0x30] sm:$0xf]
        %v1532 = vld [vmem:[%s595 + $0x34] sm:$0xf]
        %v1533 = vld [vmem:[%s595 + $0x38] sm:$0xf]
        %v1534 = vld [vmem:[%s595 + $0x3c] sm:$0xf]
        %v1535 = vld [vmem:[%s598] sm:$0x1]
        %v1537 = vperm.slane %v1535, 0
        %v1555 = vunpack.c.l.b16 %v1519
        %v1556 = vunpack.c.l.b16 %v1520
        %v1557 = vunpack.c.l.b16 %v1521
        %v1558 = vunpack.c.l.b16 %v1522
        %v1559 = vunpack.c.l.b16 %v1523
        %v1560 = vunpack.c.l.b16 %v1524
        %v1561 = vunpack.c.l.b16 %v1525
        %v1562 = vunpack.c.l.b16 %v1526
        %v1563 = vunpack.c.l.b16 %v1527
        %v1564 = vunpack.c.l.b16 %v1528
        %v1565 = vunpack.c.l.b16 %v1529
        %v1566 = vunpack.c.l.b16 %v1530
        %v1567 = vunpack.c.l.b16 %v1531
        %v1568 = vunpack.c.l.b16 %v1532
        %v1569 = vunpack.c.l.b16 %v1533
        %v1570 = vunpack.c.l.b16 %v1534
        %v1571 = vpack.c.b16 %v1556, %v1555
        %v1572 = vpack.c.b16 %v1558, %v1557
        %v1573 = vpack.c.b16 %v1560, %v1559
        %v1574 = vpack.c.b16 %v1562, %v1561
        %v1575 = vpack.c.b16 %v1564, %v1563
        %v1576 = vpack.c.b16 %v1566, %v1565
        %v1577 = vpack.c.b16 %v1568, %v1567
        %v1578 = vpack.c.b16 %v1570, %v1569
        %1587 = vmatpush.bf16.msra.mxu0 %v1578
        %1588 = vmatpush.bf16.msra.mxu0 %v1577
        %1589 = vmatpush.bf16.msra.mxu0 %v1576
        %1590 = vmatpush.bf16.msra.mxu0 %v1575
        %1591 = vmatpush.bf16.msra.mxu0 %v1574
        %1592 = vmatpush.bf16.msra.mxu0 %v1573
        %1593 = vmatpush.bf16.msra.mxu0 %v1572
        %1594 = vmatpush.bf16.msra.mxu0 %v1571
        %1595 = vmatmul.bf16.gmra.mxu0 %v1518
        %v1596 = vpop.f32.mrf.mxu0
        %v1597 = vadd.f32 %v1537, %v1596
        %v1598 = vpop.f32.mrf.mxu0
        %1599 = vdwg.mxu0
        %v1600 = vadd.f32 %v1439, %v1597
        %1601 = vst.msk [vmem:[%s553] sm:$0xff] %vm610, %v1600
        %s1602 = sand.u32 %s358, 1
        %s1603 = scalar_lea.sflag [#allocation3], %s1602
        %s1604 = sand.u32 %s358, 1
        %s1605 = smul.addr %s1604, 8
        %s1606 = scalar_lea.vmem [#allocation2], %s1605
        // Predicated region
        $region73: #{tpu_custom_call.1} parent=67 // pred_check
          %p1607 = pneg %p368
        $region74: #{tpu_custom_call.1} parent=67 // pred_check_branch
          %1609 = sbr.rel (%p1607) target = $region76
        $region75: #{tpu_custom_call.1} parent=67 // pred_region
          %1611 = vsyncadd %s1603, 0
          %s1612 = smul.addr %s30, 8
          %s1613 = scalar_lea.hbm %s12, %s1612
          %s1615 = sshll.u32 %s1606, 4
          %s1616 = int_to_ptr.vmem [resolvable:$true] %s1615
          %s1617 = sshll.u32 %s1613, 4
          %s1618 = int_to_ptr.hbm [resolvable:$true] %s1617
          %1620 = dma.vmem_to_hbm [thread:$0]  %s1616, 128, %s1618, %s1603
        $region76: #{tpu_custom_call.1} parent=67 // pred_fallthru
          _
      $region68: #{tpu_custom_call.1} parent=5 // pred_fallthru
        _
      %p1621 = scmp.le.s32.totalorder 2, %s21
      // Predicated region
      $region77: #{tpu_custom_call.1} parent=5 // pred_check
        %p1622 = pneg %p1621
      $region78: #{tpu_custom_call.1} parent=5 // pred_check_branch
        %1624 = sbr.rel (%p1622) target = $region80
      $region79: #{tpu_custom_call.1} parent=5 // pred_region
        %s1625 = ssub.s32 %s21, 2
        // Predicated region
        $region81: #{tpu_custom_call.1} parent=79 // pred_check
          %p1626 = pneg %p374
        $region82: #{tpu_custom_call.1} parent=79 // pred_check_branch
          %1628 = sbr.rel (%p1626) target = $region84
        $region83: #{tpu_custom_call.1} parent=79 // pred_region
          %s1629 = sand.u32 %s359, 1
          %s1630 = scalar_lea.sflag [#allocation3], %s1629
          %s1631 = sand.u32 %s359, 1
          %s1632 = smul.addr %s1631, 8
          %s1633 = scalar_lea.vmem [#allocation2], %s1632
          %1635 = dma.done %s1630, 128
        $region84: #{tpu_custom_call.1} parent=79 // pred_fallthru
          _
      $region80: #{tpu_custom_call.1} parent=5 // pred_fallthru
        _
    $region6: #{tpu_custom_call.1} parent=1 // loop_footer
      %s25 = sadd.s32 1, %s21
    $region7: #{tpu_custom_call.1} parent=1 // loop_footer_branch
      %20 = sbr.rel target = $region3
    $region8: #{tpu_custom_call.1} parent=1 // loop_exit
      _
    %1636 = vsyncpa [#allocation3], 1
    %s1637 = scalar_lea.sflag [#allocation3], 1
    %1638 = vsyncpa %s1637, 1

</llo_original>
